<compile_context>
chip_gen: v7x
topology: tpu7x:2x2x1
jax: 0.10.0
libtpu: 0.0.40
codegen_flags: <defaults>
</compile_context>

<pallas_src>
import functools

import jax
import jax.numpy as jnp
from jax.experimental import pallas as pl
from jax.experimental.pallas import tpu as pltpu


LN_EPS = 1e-5          # PyTorch nn.LayerNorm default
MAX_TILE_B = 1024      # large-batch tile (multiple of 8 sublanes)
SMALL_BATCH = 64       # below this: single block (pure latency path)


def _round_up(x, m):
    return ((x + m - 1) // m) * m


def _activation_dtype():
    """bf16 inter-layer activations on chips with bf16 VPU paths (v6e/v7x),
    f32 elsewhere (v5e and older have no bf16 VPU). A wrong guess only costs
    a little perf, never correctness."""
    try:
        kind = jax.devices()[0].device_kind.lower()
    except Exception:
        return jnp.float32
    if any(tag in kind for tag in ("v6", "v7", "tpu7")):
        return jnp.bfloat16
    return jnp.float32


def _linear_relu_layernorm(x, w_ref, s_ref, act_dtype):
    """Linear (bf16 operands, f32 accum) -> ReLU -> LayerNorm (f32 stats).

    s_ref is a (3, fan_out) f32 slab: row 0 = linear bias, row 1 = LN gamma,
    row 2 = LN beta.
    """
    h = jnp.dot(x.astype(jnp.bfloat16), w_ref[...],
                preferred_element_type=jnp.float32) + s_ref[0:1, :]
    h = jnp.maximum(h, 0.0)
    # One-pass stats: mu and E[h^2] are independent reductions (shorter XLU
    # dependency chain than two-pass); guard tiny cancellation in the variance.
    mu = jnp.mean(h, axis=-1, keepdims=True)
    ms = jnp.mean(h * h, axis=-1, keepdims=True)
    var = jnp.maximum(ms - mu * mu, 0.0)
    hn = (h - mu) * jax.lax.rsqrt(var + LN_EPS)
    return (hn * s_ref[1:2, :] + s_ref[2:3, :]).astype(act_dtype)


def actor_kernel(x_ref,
                 w1, s1, w2, s2, w3, s3, w4, s4, w5, s5, wo, bo,
                 o_ref, *, act_dtype):
    x = x_ref[...].astype(jnp.float32)
    x = _linear_relu_layernorm(x, w1, s1, act_dtype)   # total_state -> 512
    x = _linear_relu_layernorm(x, w2, s2, act_dtype)   # 512 -> 512
    x = _linear_relu_layernorm(x, w3, s3, act_dtype)   # 512 -> 256
    x = _linear_relu_layernorm(x, w4, s4, act_dtype)   # 256 -> 256
    x = _linear_relu_layernorm(x, w5, s5, act_dtype)   # 256 -> 128
    # Output layer is zero-padded to a multiple of 128 lanes so this store is
    # a full-width, unmasked vst; the wrapper slices the real action columns.
    y = jnp.dot(x.astype(jnp.bfloat16), wo[...],
                preferred_element_type=jnp.float32) + bo[...]
    o_ref[...] = jnp.tanh(y).astype(o_ref.dtype)


def init_actor_params(key, num_drones, state_size_per_drone, action_size_per_drone):
    """Parameters matching the PyTorch module's init, in kernel-friendly layout.

    Linear weights: kaiming_normal_(fan_in, relu) -> std = sqrt(2 / fan_in),
    stored as (in, out) in bf16.  Linear biases: 0.  LayerNorm affine:
    weight=1, bias=0.  Hidden layers pack (bias, gamma, beta) into a
    (3, fan_out) f32 slab; the output layer's weight/bias are zero-padded to a
    multiple of 128 output columns (lane-dense store).
    """
    total_state = num_drones * state_size_per_drone
    total_action = num_drones * action_size_per_drone
    out_pad = _round_up(total_action, 128)
    dims = [total_state, 512, 512, 256, 256, 128, total_action]

    params = []
    keys = jax.random.split(key, len(dims) - 1)
    for li in range(len(dims) - 1):
        fan_in, fan_out = dims[li], dims[li + 1]
        std = (2.0 / fan_in) ** 0.5
        w = (std * jax.random.normal(keys[li], (fan_in, fan_out),
                                     dtype=jnp.float32)).astype(jnp.bfloat16)
        if li < len(dims) - 2:
            slab = jnp.concatenate([
                jnp.zeros((1, fan_out), jnp.float32),   # linear bias
                jnp.ones((1, fan_out), jnp.float32),    # LayerNorm weight
                jnp.zeros((1, fan_out), jnp.float32),   # LayerNorm bias
            ], axis=0)
            params.extend([w, slab])
        else:
            wo = jnp.zeros((fan_in, out_pad), jnp.bfloat16).at[:, :fan_out].set(w)
            bo = jnp.zeros((1, out_pad), jnp.float32)
            params.extend([wo, bo])
    return tuple(params), dims


@functools.partial(jax.jit, static_argnums=(2, 3, 4))
def actor_forward(state, params, num_drones, state_size_per_drone,
                  action_size_per_drone):
    # Mirror the PyTorch `if state.dim() == 1: unsqueeze(0)` behavior.
    if state.ndim == 1:
        state = state[None, :]
    batch = state.shape[0]
    total_state = num_drones * state_size_per_drone
    total_action = num_drones * action_size_per_drone
    out_pad = _round_up(total_action, 128)
    act_dtype = _activation_dtype()

    x = state.astype(jnp.float32)

    # Batch tiling:
    #   * tiny batches     -> one block (latency path, no split overhead)
    #   * mid-size batches -> >=2 blocks so v7x's two TensorCores both work
    #   * large batches    -> 1024-row tiles to amortize per-step overhead
    # No wrapper-side padding: Pallas handles the ragged last block.
    if batch <= SMALL_BATCH:
        tile_b = batch
    elif batch <= MAX_TILE_B:
        tile_b = _round_up(pl.cdiv(batch, 2), 8)
    else:
        tile_b = MAX_TILE_B
    grid = (pl.cdiv(batch, tile_b),)

    act_spec = pl.BlockSpec((tile_b, total_state), lambda i: (i, 0))
    out_spec = pl.BlockSpec((tile_b, out_pad), lambda i: (i, 0))
    # Parameters: full-array blocks with a constant block index -> fetched once
    # and resident in VMEM across all grid steps.
    # TODO(synk): pipeline_mode=pl.Buffered(1) on these specs would drop the
    # unused second buffer (~1 MB); left off to keep lowering conservative.
    param_specs = [pl.BlockSpec(p.shape, lambda i: (0, 0)) for p in params]

    padded_out = pl.pallas_call(
        functools.partial(actor_kernel, act_dtype=act_dtype),
        out_shape=jax.ShapeDtypeStruct((batch, out_pad), jnp.float32),
        grid=grid,
        in_specs=[act_spec] + param_specs,
        out_specs=out_spec,
        compiler_params=pltpu.CompilerParams(
            dimension_semantics=("parallel",),   # v7x: batch tiles over 2 TCs
        ),
    )(x, *params)

    flat_out = padded_out[:, :total_action]
    return flat_out.reshape(batch, num_drones, action_size_per_drone)


def actor_forward_ref(state, params, num_drones, state_size_per_drone,
                      action_size_per_drone):
    """Pure-JAX reference mirroring the kernel's numerics (bf16 matmul
    operands, f32 accumulation, one-pass LayerNorm stats, padded output)."""
    if state.ndim == 1:
        state = state[None, :]
    total_action = num_drones * action_size_per_drone
    act_dtype = _activation_dtype()
    x = state.astype(jnp.float32)
    for li in range(5):
        w, slab = params[2 * li], params[2 * li + 1]
        h = jnp.dot(x.astype(jnp.bfloat16), w,
                    preferred_element_type=jnp.float32) + slab[0:1, :]
        h = jnp.maximum(h, 0.0)
        mu = jnp.mean(h, axis=-1, keepdims=True)
        ms = jnp.mean(h * h, axis=-1, keepdims=True)
        var = jnp.maximum(ms - mu * mu, 0.0)
        hn = (h - mu) * jax.lax.rsqrt(var + LN_EPS)
        x = (hn * slab[1:2, :] + slab[2:3, :]).astype(act_dtype)
    wo, bo = params[10], params[11]
    y = jnp.dot(x.astype(jnp.bfloat16), wo,
                preferred_element_type=jnp.float32) + bo
    y = jnp.tanh(y)[:, :total_action]
    return y.reshape(y.shape[0], num_drones, action_size_per_drone)


if __name__ == "__main__":
    num_drones = 4
    state_size_per_drone = 8     # total_state_size = 32
    action_size_per_drone = 2    # output dim = 8 (padded to 128 in-kernel)
    batch = 2

    key = jax.random.PRNGKey(0)
    pkey, xkey = jax.random.split(key)
    params, dims = init_actor_params(
        pkey, num_drones, state_size_per_drone, action_size_per_drone
    )
    state = jax.random.normal(
        xkey, (batch, num_drones * state_size_per_drone), dtype=jnp.float32
    )

    out = actor_forward(
        state, params, num_drones, state_size_per_drone, action_size_per_drone
    )
    out = jax.block_until_ready(out)

    assert out.shape == (batch, num_drones, action_size_per_drone), out.shape

    ref = actor_forward_ref(
        state, params, num_drones, state_size_per_drone, action_size_per_drone
    )
    max_err = float(jnp.max(jnp.abs(out - ref)))
    assert jnp.allclose(out, ref, atol=1e-3, rtol=1e-3), max_err

    print("KERNEL_OK")
</pallas_src>

<mosaic_0001>
module attributes {stable_mosaic.version = 11 : i64} {
  func.func @actor_kernel(%arg0: i32, %arg1: memref<2x32xf32, #tpu.memory_space<vmem>>, %arg2: memref<32x512xbf16, #tpu.memory_space<vmem>>, %arg3: memref<3x512xf32, #tpu.memory_space<vmem>>, %arg4: memref<512x512xbf16, #tpu.memory_space<vmem>>, %arg5: memref<3x512xf32, #tpu.memory_space<vmem>>, %arg6: memref<512x256xbf16, #tpu.memory_space<vmem>>, %arg7: memref<3x256xf32, #tpu.memory_space<vmem>>, %arg8: memref<256x256xbf16, #tpu.memory_space<vmem>>, %arg9: memref<3x256xf32, #tpu.memory_space<vmem>>, %arg10: memref<256x128xbf16, #tpu.memory_space<vmem>>, %arg11: memref<3x128xf32, #tpu.memory_space<vmem>>, %arg12: memref<128x128xbf16, #tpu.memory_space<vmem>>, %arg13: memref<1x128xf32, #tpu.memory_space<vmem>>, %arg14: memref<2x128xf32, #tpu.memory_space<vmem>>) attributes {dimension_semantics = [#tpu.dimension_semantics<parallel>], iteration_bounds = array<i64: 1>, scalar_prefetch = 0 : i64, scratch_operands = 0 : i64, tpu.core_type = #tpu.core_type<tc>, window_params = [{transform_indices = @transform_0, window_bounds = array<i64: 2, 32>}, {pipeline_mode = #tpu.pipeline_mode<synchronous>, transform_indices = @transform_1, window_bounds = array<i64: 32, 512>}, {pipeline_mode = #tpu.pipeline_mode<synchronous>, transform_indices = @transform_2, window_bounds = array<i64: 3, 512>}, {pipeline_mode = #tpu.pipeline_mode<synchronous>, transform_indices = @transform_3, window_bounds = array<i64: 512, 512>}, {pipeline_mode = #tpu.pipeline_mode<synchronous>, transform_indices = @transform_4, window_bounds = array<i64: 3, 512>}, {pipeline_mode = #tpu.pipeline_mode<synchronous>, transform_indices = @transform_5, window_bounds = array<i64: 512, 256>}, {pipeline_mode = #tpu.pipeline_mode<synchronous>, transform_indices = @transform_6, window_bounds = array<i64: 3, 256>}, {pipeline_mode = #tpu.pipeline_mode<synchronous>, transform_indices = @transform_7, window_bounds = array<i64: 256, 256>}, {pipeline_mode = #tpu.pipeline_mode<synchronous>, transform_indices = @transform_8, window_bounds = array<i64: 3, 256>}, {pipeline_mode = #tpu.pipeline_mode<synchronous>, transform_indices = @transform_9, window_bounds = array<i64: 256, 128>}, {pipeline_mode = #tpu.pipeline_mode<synchronous>, transform_indices = @transform_10, window_bounds = array<i64: 3, 128>}, {pipeline_mode = #tpu.pipeline_mode<synchronous>, transform_indices = @transform_11, window_bounds = array<i64: 128, 128>}, {pipeline_mode = #tpu.pipeline_mode<synchronous>, transform_indices = @transform_12, window_bounds = array<i64: 1, 128>}, {transform_indices = @transform_13, window_bounds = array<i64: 2, 128>}]} {
    %c0 = arith.constant 0 : index
    %c0_0 = arith.constant 0 : index
    %0 = vector.load %arg1[%c0, %c0_0] : memref<2x32xf32, #tpu.memory_space<vmem>>, vector<2x32xf32>
    %1 = arith.truncf %0 : vector<2x32xf32> to vector<2x32xbf16>
    %c0_1 = arith.constant 0 : index
    %c0_2 = arith.constant 0 : index
    %2 = vector.load %arg2[%c0_1, %c0_2] : memref<32x512xbf16, #tpu.memory_space<vmem>>, vector<32x512xbf16>
    %cst = arith.constant dense<0.000000e+00> : vector<2x512xf32>
    %3 = tpu.matmul %1, %2, %cst {dimension_numbers = #tpu.dot_dimension_numbers<[1], [0], [0], [1], [0, 0, 1, 1], [], []>} : vector<2x32xbf16>, vector<32x512xbf16>, vector<2x512xf32> -> vector<2x512xf32>
    %c0_3 = arith.constant 0 : index
    %c0_4 = arith.constant 0 : index
    %4 = vector.load %arg3[%c0_3, %c0_4] : memref<3x512xf32, #tpu.memory_space<vmem>>, vector<1x512xf32>
    %5 = vector.broadcast %4 : vector<1x512xf32> to vector<2x512xf32>
    %6 = arith.addf %3, %5 : vector<2x512xf32>
    %cst_5 = arith.constant 0.000000e+00 : f32
    %7 = vector.broadcast %cst_5 : f32 to vector<2x512xf32>
    %8 = arith.maximumf %6, %7 : vector<2x512xf32>
    %cst_6 = arith.constant dense<0.000000e+00> : vector<2xf32>
    %9 = vector.multi_reduction <add>, %8, %cst_6 [1] : vector<2x512xf32> to vector<2xf32>
    %10 = vector.shape_cast %9 : vector<2xf32> to vector<2x1xf32>
    %cst_7 = arith.constant 5.120000e+02 : f32
    %11 = vector.broadcast %cst_7 : f32 to vector<2x1xf32>
    %12 = arith.divf %10, %11 : vector<2x1xf32>
    %13 = arith.mulf %8, %8 : vector<2x512xf32>
    %cst_8 = arith.constant dense<0.000000e+00> : vector<2xf32>
    %14 = vector.multi_reduction <add>, %13, %cst_8 [1] : vector<2x512xf32> to vector<2xf32>
    %15 = vector.shape_cast %14 : vector<2xf32> to vector<2x1xf32>
    %cst_9 = arith.constant 5.120000e+02 : f32
    %16 = vector.broadcast %cst_9 : f32 to vector<2x1xf32>
    %17 = arith.divf %15, %16 : vector<2x1xf32>
    %18 = arith.mulf %12, %12 : vector<2x1xf32>
    %19 = arith.subf %17, %18 : vector<2x1xf32>
    %cst_10 = arith.constant 0.000000e+00 : f32
    %20 = vector.broadcast %cst_10 : f32 to vector<2x1xf32>
    %21 = arith.maximumf %19, %20 : vector<2x1xf32>
    %22 = vector.broadcast %12 : vector<2x1xf32> to vector<2x512xf32>
    %23 = arith.subf %8, %22 : vector<2x512xf32>
    %cst_11 = arith.constant 9.99999974E-6 : f32
    %24 = vector.broadcast %cst_11 : f32 to vector<2x1xf32>
    %25 = arith.addf %21, %24 : vector<2x1xf32>
    %26 = math.rsqrt %25 : vector<2x1xf32>
    %27 = vector.broadcast %26 : vector<2x1xf32> to vector<2x512xf32>
    %28 = arith.mulf %23, %27 : vector<2x512xf32>
    %c1 = arith.constant 1 : index
    %c0_12 = arith.constant 0 : index
    %29 = vector.load %arg3[%c1, %c0_12] : memref<3x512xf32, #tpu.memory_space<vmem>>, vector<1x512xf32>
    %30 = vector.broadcast %29 : vector<1x512xf32> to vector<2x512xf32>
    %31 = arith.mulf %28, %30 : vector<2x512xf32>
    %c2 = arith.constant 2 : index
    %c0_13 = arith.constant 0 : index
    %32 = vector.load %arg3[%c2, %c0_13] : memref<3x512xf32, #tpu.memory_space<vmem>>, vector<1x512xf32>
    %33 = vector.broadcast %32 : vector<1x512xf32> to vector<2x512xf32>
    %34 = arith.addf %31, %33 : vector<2x512xf32>
    %35 = arith.truncf %34 : vector<2x512xf32> to vector<2x512xbf16>
    %c0_14 = arith.constant 0 : index
    %c0_15 = arith.constant 0 : index
    %36 = vector.load %arg4[%c0_14, %c0_15] : memref<512x512xbf16, #tpu.memory_space<vmem>>, vector<512x512xbf16>
    %cst_16 = arith.constant dense<0.000000e+00> : vector<2x512xf32>
    %37 = tpu.matmul %35, %36, %cst_16 {dimension_numbers = #tpu.dot_dimension_numbers<[1], [0], [0], [1], [0, 0, 1, 1], [], []>} : vector<2x512xbf16>, vector<512x512xbf16>, vector<2x512xf32> -> vector<2x512xf32>
    %c0_17 = arith.constant 0 : index
    %c0_18 = arith.constant 0 : index
    %38 = vector.load %arg5[%c0_17, %c0_18] : memref<3x512xf32, #tpu.memory_space<vmem>>, vector<1x512xf32>
    %39 = vector.broadcast %38 : vector<1x512xf32> to vector<2x512xf32>
    %40 = arith.addf %37, %39 : vector<2x512xf32>
    %cst_19 = arith.constant 0.000000e+00 : f32
    %41 = vector.broadcast %cst_19 : f32 to vector<2x512xf32>
    %42 = arith.maximumf %40, %41 : vector<2x512xf32>
    %cst_20 = arith.constant dense<0.000000e+00> : vector<2xf32>
    %43 = vector.multi_reduction <add>, %42, %cst_20 [1] : vector<2x512xf32> to vector<2xf32>
    %44 = vector.shape_cast %43 : vector<2xf32> to vector<2x1xf32>
    %cst_21 = arith.constant 5.120000e+02 : f32
    %45 = vector.broadcast %cst_21 : f32 to vector<2x1xf32>
    %46 = arith.divf %44, %45 : vector<2x1xf32>
    %47 = arith.mulf %42, %42 : vector<2x512xf32>
    %cst_22 = arith.constant dense<0.000000e+00> : vector<2xf32>
    %48 = vector.multi_reduction <add>, %47, %cst_22 [1] : vector<2x512xf32> to vector<2xf32>
    %49 = vector.shape_cast %48 : vector<2xf32> to vector<2x1xf32>
    %cst_23 = arith.constant 5.120000e+02 : f32
    %50 = vector.broadcast %cst_23 : f32 to vector<2x1xf32>
    %51 = arith.divf %49, %50 : vector<2x1xf32>
    %52 = arith.mulf %46, %46 : vector<2x1xf32>
    %53 = arith.subf %51, %52 : vector<2x1xf32>
    %cst_24 = arith.constant 0.000000e+00 : f32
    %54 = vector.broadcast %cst_24 : f32 to vector<2x1xf32>
    %55 = arith.maximumf %53, %54 : vector<2x1xf32>
    %56 = vector.broadcast %46 : vector<2x1xf32> to vector<2x512xf32>
    %57 = arith.subf %42, %56 : vector<2x512xf32>
    %cst_25 = arith.constant 9.99999974E-6 : f32
    %58 = vector.broadcast %cst_25 : f32 to vector<2x1xf32>
    %59 = arith.addf %55, %58 : vector<2x1xf32>
    %60 = math.rsqrt %59 : vector<2x1xf32>
    %61 = vector.broadcast %60 : vector<2x1xf32> to vector<2x512xf32>
    %62 = arith.mulf %57, %61 : vector<2x512xf32>
    %c1_26 = arith.constant 1 : index
    %c0_27 = arith.constant 0 : index
    %63 = vector.load %arg5[%c1_26, %c0_27] : memref<3x512xf32, #tpu.memory_space<vmem>>, vector<1x512xf32>
    %64 = vector.broadcast %63 : vector<1x512xf32> to vector<2x512xf32>
    %65 = arith.mulf %62, %64 : vector<2x512xf32>
    %c2_28 = arith.constant 2 : index
    %c0_29 = arith.constant 0 : index
    %66 = vector.load %arg5[%c2_28, %c0_29] : memref<3x512xf32, #tpu.memory_space<vmem>>, vector<1x512xf32>
    %67 = vector.broadcast %66 : vector<1x512xf32> to vector<2x512xf32>
    %68 = arith.addf %65, %67 : vector<2x512xf32>
    %69 = arith.truncf %68 : vector<2x512xf32> to vector<2x512xbf16>
    %c0_30 = arith.constant 0 : index
    %c0_31 = arith.constant 0 : index
    %70 = vector.load %arg6[%c0_30, %c0_31] : memref<512x256xbf16, #tpu.memory_space<vmem>>, vector<512x256xbf16>
    %cst_32 = arith.constant dense<0.000000e+00> : vector<2x256xf32>
    %71 = tpu.matmul %69, %70, %cst_32 {dimension_numbers = #tpu.dot_dimension_numbers<[1], [0], [0], [1], [0, 0, 1, 1], [], []>} : vector<2x512xbf16>, vector<512x256xbf16>, vector<2x256xf32> -> vector<2x256xf32>
    %c0_33 = arith.constant 0 : index
    %c0_34 = arith.constant 0 : index
    %72 = vector.load %arg7[%c0_33, %c0_34] : memref<3x256xf32, #tpu.memory_space<vmem>>, vector<1x256xf32>
    %73 = vector.broadcast %72 : vector<1x256xf32> to vector<2x256xf32>
    %74 = arith.addf %71, %73 : vector<2x256xf32>
    %cst_35 = arith.constant 0.000000e+00 : f32
    %75 = vector.broadcast %cst_35 : f32 to vector<2x256xf32>
    %76 = arith.maximumf %74, %75 : vector<2x256xf32>
    %cst_36 = arith.constant dense<0.000000e+00> : vector<2xf32>
    %77 = vector.multi_reduction <add>, %76, %cst_36 [1] : vector<2x256xf32> to vector<2xf32>
    %78 = vector.shape_cast %77 : vector<2xf32> to vector<2x1xf32>
    %cst_37 = arith.constant 2.560000e+02 : f32
    %79 = vector.broadcast %cst_37 : f32 to vector<2x1xf32>
    %80 = arith.divf %78, %79 : vector<2x1xf32>
    %81 = arith.mulf %76, %76 : vector<2x256xf32>
    %cst_38 = arith.constant dense<0.000000e+00> : vector<2xf32>
    %82 = vector.multi_reduction <add>, %81, %cst_38 [1] : vector<2x256xf32> to vector<2xf32>
    %83 = vector.shape_cast %82 : vector<2xf32> to vector<2x1xf32>
    %cst_39 = arith.constant 2.560000e+02 : f32
    %84 = vector.broadcast %cst_39 : f32 to vector<2x1xf32>
    %85 = arith.divf %83, %84 : vector<2x1xf32>
    %86 = arith.mulf %80, %80 : vector<2x1xf32>
    %87 = arith.subf %85, %86 : vector<2x1xf32>
    %cst_40 = arith.constant 0.000000e+00 : f32
    %88 = vector.broadcast %cst_40 : f32 to vector<2x1xf32>
    %89 = arith.maximumf %87, %88 : vector<2x1xf32>
    %90 = vector.broadcast %80 : vector<2x1xf32> to vector<2x256xf32>
    %91 = arith.subf %76, %90 : vector<2x256xf32>
    %cst_41 = arith.constant 9.99999974E-6 : f32
    %92 = vector.broadcast %cst_41 : f32 to vector<2x1xf32>
    %93 = arith.addf %89, %92 : vector<2x1xf32>
    %94 = math.rsqrt %93 : vector<2x1xf32>
    %95 = vector.broadcast %94 : vector<2x1xf32> to vector<2x256xf32>
    %96 = arith.mulf %91, %95 : vector<2x256xf32>
    %c1_42 = arith.constant 1 : index
    %c0_43 = arith.constant 0 : index
    %97 = vector.load %arg7[%c1_42, %c0_43] : memref<3x256xf32, #tpu.memory_space<vmem>>, vector<1x256xf32>
    %98 = vector.broadcast %97 : vector<1x256xf32> to vector<2x256xf32>
    %99 = arith.mulf %96, %98 : vector<2x256xf32>
    %c2_44 = arith.constant 2 : index
    %c0_45 = arith.constant 0 : index
    %100 = vector.load %arg7[%c2_44, %c0_45] : memref<3x256xf32, #tpu.memory_space<vmem>>, vector<1x256xf32>
    %101 = vector.broadcast %100 : vector<1x256xf32> to vector<2x256xf32>
    %102 = arith.addf %99, %101 : vector<2x256xf32>
    %103 = arith.truncf %102 : vector<2x256xf32> to vector<2x256xbf16>
    %c0_46 = arith.constant 0 : index
    %c0_47 = arith.constant 0 : index
    %104 = vector.load %arg8[%c0_46, %c0_47] : memref<256x256xbf16, #tpu.memory_space<vmem>>, vector<256x256xbf16>
    %cst_48 = arith.constant dense<0.000000e+00> : vector<2x256xf32>
    %105 = tpu.matmul %103, %104, %cst_48 {dimension_numbers = #tpu.dot_dimension_numbers<[1], [0], [0], [1], [0, 0, 1, 1], [], []>} : vector<2x256xbf16>, vector<256x256xbf16>, vector<2x256xf32> -> vector<2x256xf32>
    %c0_49 = arith.constant 0 : index
    %c0_50 = arith.constant 0 : index
    %106 = vector.load %arg9[%c0_49, %c0_50] : memref<3x256xf32, #tpu.memory_space<vmem>>, vector<1x256xf32>
    %107 = vector.broadcast %106 : vector<1x256xf32> to vector<2x256xf32>
    %108 = arith.addf %105, %107 : vector<2x256xf32>
    %cst_51 = arith.constant 0.000000e+00 : f32
    %109 = vector.broadcast %cst_51 : f32 to vector<2x256xf32>
    %110 = arith.maximumf %108, %109 : vector<2x256xf32>
    %cst_52 = arith.constant dense<0.000000e+00> : vector<2xf32>
    %111 = vector.multi_reduction <add>, %110, %cst_52 [1] : vector<2x256xf32> to vector<2xf32>
    %112 = vector.shape_cast %111 : vector<2xf32> to vector<2x1xf32>
    %cst_53 = arith.constant 2.560000e+02 : f32
    %113 = vector.broadcast %cst_53 : f32 to vector<2x1xf32>
    %114 = arith.divf %112, %113 : vector<2x1xf32>
    %115 = arith.mulf %110, %110 : vector<2x256xf32>
    %cst_54 = arith.constant dense<0.000000e+00> : vector<2xf32>
    %116 = vector.multi_reduction <add>, %115, %cst_54 [1] : vector<2x256xf32> to vector<2xf32>
    %117 = vector.shape_cast %116 : vector<2xf32> to vector<2x1xf32>
    %cst_55 = arith.constant 2.560000e+02 : f32
    %118 = vector.broadcast %cst_55 : f32 to vector<2x1xf32>
    %119 = arith.divf %117, %118 : vector<2x1xf32>
    %120 = arith.mulf %114, %114 : vector<2x1xf32>
    %121 = arith.subf %119, %120 : vector<2x1xf32>
    %cst_56 = arith.constant 0.000000e+00 : f32
    %122 = vector.broadcast %cst_56 : f32 to vector<2x1xf32>
    %123 = arith.maximumf %121, %122 : vector<2x1xf32>
    %124 = vector.broadcast %114 : vector<2x1xf32> to vector<2x256xf32>
    %125 = arith.subf %110, %124 : vector<2x256xf32>
    %cst_57 = arith.constant 9.99999974E-6 : f32
    %126 = vector.broadcast %cst_57 : f32 to vector<2x1xf32>
    %127 = arith.addf %123, %126 : vector<2x1xf32>
    %128 = math.rsqrt %127 : vector<2x1xf32>
    %129 = vector.broadcast %128 : vector<2x1xf32> to vector<2x256xf32>
    %130 = arith.mulf %125, %129 : vector<2x256xf32>
    %c1_58 = arith.constant 1 : index
    %c0_59 = arith.constant 0 : index
    %131 = vector.load %arg9[%c1_58, %c0_59] : memref<3x256xf32, #tpu.memory_space<vmem>>, vector<1x256xf32>
    %132 = vector.broadcast %131 : vector<1x256xf32> to vector<2x256xf32>
    %133 = arith.mulf %130, %132 : vector<2x256xf32>
    %c2_60 = arith.constant 2 : index
    %c0_61 = arith.constant 0 : index
    %134 = vector.load %arg9[%c2_60, %c0_61] : memref<3x256xf32, #tpu.memory_space<vmem>>, vector<1x256xf32>
    %135 = vector.broadcast %134 : vector<1x256xf32> to vector<2x256xf32>
    %136 = arith.addf %133, %135 : vector<2x256xf32>
    %137 = arith.truncf %136 : vector<2x256xf32> to vector<2x256xbf16>
    %c0_62 = arith.constant 0 : index
    %c0_63 = arith.constant 0 : index
    %138 = vector.load %arg10[%c0_62, %c0_63] : memref<256x128xbf16, #tpu.memory_space<vmem>>, vector<256x128xbf16>
    %cst_64 = arith.constant dense<0.000000e+00> : vector<2x128xf32>
    %139 = tpu.matmul %137, %138, %cst_64 {dimension_numbers = #tpu.dot_dimension_numbers<[1], [0], [0], [1], [0, 0, 1, 1], [], []>} : vector<2x256xbf16>, vector<256x128xbf16>, vector<2x128xf32> -> vector<2x128xf32>
    %c0_65 = arith.constant 0 : index
    %c0_66 = arith.constant 0 : index
    %140 = vector.load %arg11[%c0_65, %c0_66] : memref<3x128xf32, #tpu.memory_space<vmem>>, vector<1x128xf32>
    %141 = vector.broadcast %140 : vector<1x128xf32> to vector<2x128xf32>
    %142 = arith.addf %139, %141 : vector<2x128xf32>
    %cst_67 = arith.constant 0.000000e+00 : f32
    %143 = vector.broadcast %cst_67 : f32 to vector<2x128xf32>
    %144 = arith.maximumf %142, %143 : vector<2x128xf32>
    %cst_68 = arith.constant dense<0.000000e+00> : vector<2xf32>
    %145 = vector.multi_reduction <add>, %144, %cst_68 [1] : vector<2x128xf32> to vector<2xf32>
    %146 = vector.shape_cast %145 : vector<2xf32> to vector<2x1xf32>
    %cst_69 = arith.constant 1.280000e+02 : f32
    %147 = vector.broadcast %cst_69 : f32 to vector<2x1xf32>
    %148 = arith.divf %146, %147 : vector<2x1xf32>
    %149 = arith.mulf %144, %144 : vector<2x128xf32>
    %cst_70 = arith.constant dense<0.000000e+00> : vector<2xf32>
    %150 = vector.multi_reduction <add>, %149, %cst_70 [1] : vector<2x128xf32> to vector<2xf32>
    %151 = vector.shape_cast %150 : vector<2xf32> to vector<2x1xf32>
    %cst_71 = arith.constant 1.280000e+02 : f32
    %152 = vector.broadcast %cst_71 : f32 to vector<2x1xf32>
    %153 = arith.divf %151, %152 : vector<2x1xf32>
    %154 = arith.mulf %148, %148 : vector<2x1xf32>
    %155 = arith.subf %153, %154 : vector<2x1xf32>
    %cst_72 = arith.constant 0.000000e+00 : f32
    %156 = vector.broadcast %cst_72 : f32 to vector<2x1xf32>
    %157 = arith.maximumf %155, %156 : vector<2x1xf32>
    %158 = vector.broadcast %148 : vector<2x1xf32> to vector<2x128xf32>
    %159 = arith.subf %144, %158 : vector<2x128xf32>
    %cst_73 = arith.constant 9.99999974E-6 : f32
    %160 = vector.broadcast %cst_73 : f32 to vector<2x1xf32>
    %161 = arith.addf %157, %160 : vector<2x1xf32>
    %162 = math.rsqrt %161 : vector<2x1xf32>
    %163 = vector.broadcast %162 : vector<2x1xf32> to vector<2x128xf32>
    %164 = arith.mulf %159, %163 : vector<2x128xf32>
    %c1_74 = arith.constant 1 : index
    %c0_75 = arith.constant 0 : index
    %165 = vector.load %arg11[%c1_74, %c0_75] : memref<3x128xf32, #tpu.memory_space<vmem>>, vector<1x128xf32>
    %166 = vector.broadcast %165 : vector<1x128xf32> to vector<2x128xf32>
    %167 = arith.mulf %164, %166 : vector<2x128xf32>
    %c2_76 = arith.constant 2 : index
    %c0_77 = arith.constant 0 : index
    %168 = vector.load %arg11[%c2_76, %c0_77] : memref<3x128xf32, #tpu.memory_space<vmem>>, vector<1x128xf32>
    %169 = vector.broadcast %168 : vector<1x128xf32> to vector<2x128xf32>
    %170 = arith.addf %167, %169 : vector<2x128xf32>
    %171 = arith.truncf %170 : vector<2x128xf32> to vector<2x128xbf16>
    %c0_78 = arith.constant 0 : index
    %c0_79 = arith.constant 0 : index
    %172 = vector.load %arg12[%c0_78, %c0_79] : memref<128x128xbf16, #tpu.memory_space<vmem>>, vector<128x128xbf16>
    %cst_80 = arith.constant dense<0.000000e+00> : vector<2x128xf32>
    %173 = tpu.matmul %171, %172, %cst_80 {dimension_numbers = #tpu.dot_dimension_numbers<[1], [0], [0], [1], [0, 0, 1, 1], [], []>} : vector<2x128xbf16>, vector<128x128xbf16>, vector<2x128xf32> -> vector<2x128xf32>
    %c0_81 = arith.constant 0 : index
    %c0_82 = arith.constant 0 : index
    %174 = vector.load %arg13[%c0_81, %c0_82] : memref<1x128xf32, #tpu.memory_space<vmem>>, vector<1x128xf32>
    %175 = vector.broadcast %174 : vector<1x128xf32> to vector<2x128xf32>
    %176 = arith.addf %173, %175 : vector<2x128xf32>
    %177 = math.tanh %176 : vector<2x128xf32>
    %c0_83 = arith.constant 0 : index
    %c0_84 = arith.constant 0 : index
    %178 = vector.load %arg14[%c0_83, %c0_84] : memref<2x128xf32, #tpu.memory_space<vmem>>, vector<2x128xf32>
    tpu.vector_store %arg14[%c0_83, %c0_84], %177 {strides = array<i32>} : memref<2x128xf32, #tpu.memory_space<vmem>>, vector<2x128xf32>,
    return
  }
  func.func @transform_0(%arg0: i32) -> (i32, i32) {
    %c0_i32 = arith.constant 0 : i32
    %c0_i32_0 = arith.constant 0 : i32
    return %arg0, %c0_i32 : i32, i32
  }
  func.func @transform_1(%arg0: i32) -> (i32, i32) {
    %c0_i32 = arith.constant 0 : i32
    %c0_i32_0 = arith.constant 0 : i32
    %c0_i32_1 = arith.constant 0 : i32
    return %c0_i32, %c0_i32_0 : i32, i32
  }
  func.func @transform_2(%arg0: i32) -> (i32, i32) {
    %c0_i32 = arith.constant 0 : i32
    %c0_i32_0 = arith.constant 0 : i32
    %c0_i32_1 = arith.constant 0 : i32
    return %c0_i32, %c0_i32_0 : i32, i32
  }
  func.func @transform_3(%arg0: i32) -> (i32, i32) {
    %c0_i32 = arith.constant 0 : i32
    %c0_i32_0 = arith.constant 0 : i32
    %c0_i32_1 = arith.constant 0 : i32
    return %c0_i32, %c0_i32_0 : i32, i32
  }
  func.func @transform_4(%arg0: i32) -> (i32, i32) {
    %c0_i32 = arith.constant 0 : i32
    %c0_i32_0 = arith.constant 0 : i32
    %c0_i32_1 = arith.constant 0 : i32
    return %c0_i32, %c0_i32_0 : i32, i32
  }
  func.func @transform_5(%arg0: i32) -> (i32, i32) {
    %c0_i32 = arith.constant 0 : i32
    %c0_i32_0 = arith.constant 0 : i32
    %c0_i32_1 = arith.constant 0 : i32
    return %c0_i32, %c0_i32_0 : i32, i32
  }
  func.func @transform_6(%arg0: i32) -> (i32, i32) {
    %c0_i32 = arith.constant 0 : i32
    %c0_i32_0 = arith.constant 0 : i32
    %c0_i32_1 = arith.constant 0 : i32
    return %c0_i32, %c0_i32_0 : i32, i32
  }
  func.func @transform_7(%arg0: i32) -> (i32, i32) {
    %c0_i32 = arith.constant 0 : i32
    %c0_i32_0 = arith.constant 0 : i32
    %c0_i32_1 = arith.constant 0 : i32
    return %c0_i32, %c0_i32_0 : i32, i32
  }
  func.func @transform_8(%arg0: i32) -> (i32, i32) {
    %c0_i32 = arith.constant 0 : i32
    %c0_i32_0 = arith.constant 0 : i32
    %c0_i32_1 = arith.constant 0 : i32
    return %c0_i32, %c0_i32_0 : i32, i32
  }
  func.func @transform_9(%arg0: i32) -> (i32, i32) {
    %c0_i32 = arith.constant 0 : i32
    %c0_i32_0 = arith.constant 0 : i32
    %c0_i32_1 = arith.constant 0 : i32
    return %c0_i32, %c0_i32_0 : i32, i32
  }
  func.func @transform_10(%arg0: i32) -> (i32, i32) {
    %c0_i32 = arith.constant 0 : i32
    %c0_i32_0 = arith.constant 0 : i32
    %c0_i32_1 = arith.constant 0 : i32
    return %c0_i32, %c0_i32_0 : i32, i32
  }
  func.func @transform_11(%arg0: i32) -> (i32, i32) {
    %c0_i32 = arith.constant 0 : i32
    %c0_i32_0 = arith.constant 0 : i32
    %c0_i32_1 = arith.constant 0 : i32
    return %c0_i32, %c0_i32_0 : i32, i32
  }
  func.func @transform_12(%arg0: i32) -> (i32, i32) {
    %c0_i32 = arith.constant 0 : i32
    %c0_i32_0 = arith.constant 0 : i32
    %c0_i32_1 = arith.constant 0 : i32
    return %c0_i32, %c0_i32_0 : i32, i32
  }
  func.func @transform_13(%arg0: i32) -> (i32, i32) {
    %c0_i32 = arith.constant 0 : i32
    %c0_i32_0 = arith.constant 0 : i32
    return %arg0, %c0_i32 : i32, i32
  }
}

</mosaic_0001>

<llo_original>
// kernel: actor_forward.1
$region0: #{actor_forward.1}
  #allocation0 [shape = 'u32[]', space=smem, size = 0x4, offset = 0x4, fixed_abs, tag = 'smem constant byte address 0x4 - core index']
  #allocation1 [shape = 'u32[144,128]{1,0:T(1,128)}', space=vmem, size = 0x12000, scoped, tag = 'internal scratch']
  %s0 = inlined_call_operand.hbm [shape: f32[2,32], index: 0, kind: input, shape index: {}]
  %s1 = inlined_call_operand.hbm [shape: bf16[32,512], index: 1, kind: input, shape index: {}]
  %s2 = inlined_call_operand.hbm [shape: f32[3,512], index: 2, kind: input, shape index: {}]
  %s3 = inlined_call_operand.hbm [shape: bf16[512,512], index: 3, kind: input, shape index: {}]
  %s4 = inlined_call_operand.hbm [shape: f32[3,512], index: 4, kind: input, shape index: {}]
  %s5 = inlined_call_operand.hbm [shape: bf16[512,256], index: 5, kind: input, shape index: {}]
  %s6 = inlined_call_operand.vmem [shape: f32[3,256], index: 6, kind: input, shape index: {}]
  %s7 = inlined_call_operand.hbm [shape: bf16[256,256], index: 7, kind: input, shape index: {}]
  %s8 = inlined_call_operand.vmem [shape: f32[3,256], index: 8, kind: input, shape index: {}]
  %s9 = inlined_call_operand.hbm [shape: bf16[256,128], index: 9, kind: input, shape index: {}]
  %s10 = inlined_call_operand.vmem [shape: f32[3,128], index: 10, kind: input, shape index: {}]
  %s11 = inlined_call_operand.hbm [shape: bf16[128,128], index: 11, kind: input, shape index: {}]
  %s12 = inlined_call_operand.vmem [shape: f32[1,128], index: 12, kind: input, shape index: {}]
  %s13 = inlined_call_operand.vmem [shape: f32[2,128], index: 13, kind: output, shape index: {}]
  %s14 = sld [smem:[#allocation0]]
  $region98: #{actor_forward.1} parent=0
    _
  %s16 = ssub.s32 1, %s14
  %s17 = scalar_select 0, %s16, %s14
  $region1: #{actor_forward.1} parent=0
    #allocation2 [shape = 'u8[1024]{0}', space=vmem, size = 0x400, scoped, tag = 'input window, operand 0, single buffered']
    #allocation3 [shape = 's32[1]{0}', space=sflag, size = 0x4, scoped, tag = 'scoped memory for actor_forward.1']
    #allocation4 [shape = 'u8[32768]{0}', space=vmem, size = 0x8000, scoped, tag = 'input window, operand 1, single buffered']
    #allocation5 [shape = 's32[1]{0}', space=sflag, size = 0x4, scoped, tag = 'scoped memory for actor_forward.1']
    #allocation6 [shape = 'u8[8192]{0}', space=vmem, size = 0x2000, scoped, tag = 'input window, operand 2, single buffered']
    #allocation7 [shape = 'u8[524288]{0}', space=vmem, size = 0x80000, scoped, tag = 'input window, operand 3, single buffered']
    #allocation8 [shape = 's32[1]{0}', space=sflag, size = 0x4, scoped, tag = 'scoped memory for actor_forward.1']
    #allocation9 [shape = 'u8[8192]{0}', space=vmem, size = 0x2000, scoped, tag = 'input window, operand 4, single buffered']
    #allocation10 [shape = 'u8[262144]{0}', space=vmem, size = 0x40000, scoped, tag = 'input window, operand 5, single buffered']
    #allocation11 [shape = 's32[1]{0}', space=sflag, size = 0x4, scoped, tag = 'scoped memory for actor_forward.1']
    #allocation12 [shape = 'u8[131072]{0}', space=vmem, size = 0x20000, scoped, tag = 'input window, operand 7, single buffered']
    #allocation13 [shape = 'u8[65536]{0}', space=vmem, size = 0x10000, scoped, tag = 'input window, operand 9, single buffered']
    #allocation14 [shape = 's32[1]{0}', space=sflag, size = 0x4, scoped, tag = 'scoped memory for actor_forward.1']
    #allocation15 [shape = 'u8[32768]{0}', space=vmem, size = 0x8000, scoped, tag = 'input window, operand 11, single buffered']
    %18 = vsyncpa [#allocation3], 0
    %19 = vsyncpa [#allocation5], 0
    %20 = vsyncpa [#allocation8], 0
    %21 = vsyncpa [#allocation11], 0
    %22 = vsyncpa [#allocation14], 0
    // Predicated region
    $region2: #{actor_forward.1} parent=1 // pred_check
      _
    $region3: #{actor_forward.1} parent=1 // pred_check_branch
      %24 = sbr.rel (0) target = $region5
    $region4: #{actor_forward.1} parent=1 // pred_region
      %s26 = ssub.s32 32, 32
      %27 = vsyncadd [#allocation3], %s26
      %s29 = sshll.u32 [#allocation2], 4
      %s30 = int_to_ptr.vmem [resolvable:$true] %s29
      %32 = dma.hbm_to_vmem [thread:$0]  %s0, 32, %s30, [#allocation3]
    $region5: #{actor_forward.1} parent=1 // pred_fallthru
      _
    // Predicated region
    $region6: #{actor_forward.1} parent=1 // pred_check
      _
    $region7: #{actor_forward.1} parent=1 // pred_check_branch
      %34 = sbr.rel (0) target = $region9
    $region8: #{actor_forward.1} parent=1 // pred_region
      %s36 = ssub.s32 1024, 1024
      %37 = vsyncadd [#allocation5], %s36
      %s38 = sshll.u32 [#allocation4], 4
      %s39 = int_to_ptr.vmem [resolvable:$true] %s38
      %44 = dma.hbm_to_vmem [thread:$0]  %s1, 1024, %s39, [#allocation5], 256, 256, 16
    $region9: #{actor_forward.1} parent=1 // pred_fallthru
      _
    // Predicated region
    $region10: #{actor_forward.1} parent=1 // pred_check
      _
    $region11: #{actor_forward.1} parent=1 // pred_check_branch
      %46 = sbr.rel (0) target = $region13
    $region12: #{actor_forward.1} parent=1 // pred_region
      %s48 = ssub.s32 256, 256
      %49 = vsyncadd [#allocation5], %s48
      %s51 = sshll.u32 [#allocation6], 4
      %s52 = int_to_ptr.vmem [resolvable:$true] %s51
      %54 = dma.hbm_to_vmem [thread:$0]  %s2, 256, %s52, [#allocation5]
    $region13: #{actor_forward.1} parent=1 // pred_fallthru
      _
    // Predicated region
    $region14: #{actor_forward.1} parent=1 // pred_check
      _
    $region15: #{actor_forward.1} parent=1 // pred_check_branch
      %56 = sbr.rel (0) target = $region17
    $region16: #{actor_forward.1} parent=1 // pred_region
      %s58 = ssub.s32 16384, 16384
      %59 = vsyncadd [#allocation8], %s58
      %s60 = sshll.u32 [#allocation7], 4
      %s61 = int_to_ptr.vmem [resolvable:$true] %s60
      %66 = dma.hbm_to_vmem [thread:$0]  %s3, 16384, %s61, [#allocation8], 256, 256, 16
    $region17: #{actor_forward.1} parent=1 // pred_fallthru
      _
    // Predicated region
    $region18: #{actor_forward.1} parent=1 // pred_check
      _
    $region19: #{actor_forward.1} parent=1 // pred_check_branch
      %68 = sbr.rel (0) target = $region21
    $region20: #{actor_forward.1} parent=1 // pred_region
      %s70 = ssub.s32 256, 256
      %71 = vsyncadd [#allocation8], %s70
      %s73 = sshll.u32 [#allocation9], 4
      %s74 = int_to_ptr.vmem [resolvable:$true] %s73
      %76 = dma.hbm_to_vmem [thread:$0]  %s4, 256, %s74, [#allocation8]
    $region21: #{actor_forward.1} parent=1 // pred_fallthru
      _
    // Predicated region
    $region22: #{actor_forward.1} parent=1 // pred_check
      _
    $region23: #{actor_forward.1} parent=1 // pred_check_branch
      %78 = sbr.rel (0) target = $region25
    $region24: #{actor_forward.1} parent=1 // pred_region
      %s80 = ssub.s32 8192, 8192
      %81 = vsyncadd [#allocation11], %s80
      %s82 = sshll.u32 [#allocation10], 4
      %s83 = int_to_ptr.vmem [resolvable:$true] %s82
      %88 = dma.hbm_to_vmem [thread:$0]  %s5, 8192, %s83, [#allocation11], 128, 128, 8
    $region25: #{actor_forward.1} parent=1 // pred_fallthru
      _
    // Predicated region
    $region26: #{actor_forward.1} parent=1 // pred_check
      _
    $region27: #{actor_forward.1} parent=1 // pred_check_branch
      %90 = sbr.rel (0) target = $region29
    $region28: #{actor_forward.1} parent=1 // pred_region
      _
    $region29: #{actor_forward.1} parent=1 // pred_fallthru
      _
    // Predicated region
    $region30: #{actor_forward.1} parent=1 // pred_check
      _
    $region31: #{actor_forward.1} parent=1 // pred_check_branch
      %92 = sbr.rel (0) target = $region33
    $region32: #{actor_forward.1} parent=1 // pred_region
      %s94 = ssub.s32 4096, 4096
      %95 = vsyncadd [#allocation11], %s94
      %s96 = sshll.u32 [#allocation12], 4
      %s97 = int_to_ptr.vmem [resolvable:$true] %s96
      %102 = dma.hbm_to_vmem [thread:$0]  %s7, 4096, %s97, [#allocation11], 128, 128, 8
    $region33: #{actor_forward.1} parent=1 // pred_fallthru
      _
    // Predicated region
    $region34: #{actor_forward.1} parent=1 // pred_check
      _
    $region35: #{actor_forward.1} parent=1 // pred_check_branch
      %104 = sbr.rel (0) target = $region37
    $region36: #{actor_forward.1} parent=1 // pred_region
      _
    $region37: #{actor_forward.1} parent=1 // pred_fallthru
      _
    // Predicated region
    $region38: #{actor_forward.1} parent=1 // pred_check
      _
    $region39: #{actor_forward.1} parent=1 // pred_check_branch
      %106 = sbr.rel (0) target = $region41
    $region40: #{actor_forward.1} parent=1 // pred_region
      %s108 = ssub.s32 2048, 2048
      %109 = vsyncadd [#allocation14], %s108
      %s110 = sshll.u32 [#allocation13], 4
      %s111 = int_to_ptr.vmem [resolvable:$true] %s110
      %116 = dma.hbm_to_vmem [thread:$0]  %s9, 2048, %s111, [#allocation14], 64, 64, 4
    $region41: #{actor_forward.1} parent=1 // pred_fallthru
      _
    // Predicated region
    $region42: #{actor_forward.1} parent=1 // pred_check
      _
    $region43: #{actor_forward.1} parent=1 // pred_check_branch
      %118 = sbr.rel (0) target = $region45
    $region44: #{actor_forward.1} parent=1 // pred_region
      _
    $region45: #{actor_forward.1} parent=1 // pred_fallthru
      _
    // Predicated region
    $region46: #{actor_forward.1} parent=1 // pred_check
      _
    $region47: #{actor_forward.1} parent=1 // pred_check_branch
      %120 = sbr.rel (0) target = $region49
    $region48: #{actor_forward.1} parent=1 // pred_region
      %s122 = ssub.s32 1024, 1024
      %123 = vsyncadd [#allocation14], %s122
      %s124 = sshll.u32 [#allocation15], 4
      %s125 = int_to_ptr.vmem [resolvable:$true] %s124
      %130 = dma.hbm_to_vmem [thread:$0]  %s11, 1024, %s125, [#allocation14], 64, 64, 4
    $region49: #{actor_forward.1} parent=1 // pred_fallthru
      _
    // Predicated region
    $region50: #{actor_forward.1} parent=1 // pred_check
      _
    $region51: #{actor_forward.1} parent=1 // pred_check_branch
      %132 = sbr.rel (0) target = $region53
    $region52: #{actor_forward.1} parent=1 // pred_region
      _
    $region53: #{actor_forward.1} parent=1 // pred_fallthru
      _
    // Predicated region
    $region54: #{actor_forward.1} parent=1 // pred_check
      _
    $region55: #{actor_forward.1} parent=1 // pred_check_branch
      %134 = sbr.rel (0) target = $region57
    $region56: #{actor_forward.1} parent=1 // pred_region
      %135 = dma.done [#allocation3], 32
    $region57: #{actor_forward.1} parent=1 // pred_fallthru
      _
    // Predicated region
    $region58: #{actor_forward.1} parent=1 // pred_check
      _
    $region59: #{actor_forward.1} parent=1 // pred_check_branch
      %137 = sbr.rel (0) target = $region61
    $region60: #{actor_forward.1} parent=1 // pred_region
      %138 = dma.done [#allocation5], 1024
    $region61: #{actor_forward.1} parent=1 // pred_fallthru
      _
    // Predicated region
    $region62: #{actor_forward.1} parent=1 // pred_check
      _
    $region63: #{actor_forward.1} parent=1 // pred_check_branch
      %140 = sbr.rel (0) target = $region65
    $region64: #{actor_forward.1} parent=1 // pred_region
      %141 = dma.done [#allocation5], 256
    $region65: #{actor_forward.1} parent=1 // pred_fallthru
      _
    // Predicated region
    $region66: #{actor_forward.1} parent=1 // pred_check
      _
    $region67: #{actor_forward.1} parent=1 // pred_check_branch
      %143 = sbr.rel (0) target = $region69
    $region68: #{actor_forward.1} parent=1 // pred_region
      %144 = dma.done [#allocation8], 16384
    $region69: #{actor_forward.1} parent=1 // pred_fallthru
      _
    // Predicated region
    $region70: #{actor_forward.1} parent=1 // pred_check
      _
    $region71: #{actor_forward.1} parent=1 // pred_check_branch
      %146 = sbr.rel (0) target = $region73
    $region72: #{actor_forward.1} parent=1 // pred_region
      %147 = dma.done [#allocation8], 256
    $region73: #{actor_forward.1} parent=1 // pred_fallthru
      _
    // Predicated region
    $region74: #{actor_forward.1} parent=1 // pred_check
      _
    $region75: #{actor_forward.1} parent=1 // pred_check_branch
      %149 = sbr.rel (0) target = $region77
    $region76: #{actor_forward.1} parent=1 // pred_region
      %150 = dma.done [#allocation11], 8192
    $region77: #{actor_forward.1} parent=1 // pred_fallthru
      _
    // Predicated region
    $region78: #{actor_forward.1} parent=1 // pred_check
      _
    $region79: #{actor_forward.1} parent=1 // pred_check_branch
      %152 = sbr.rel (0) target = $region81
    $region80: #{actor_forward.1} parent=1 // pred_region
      %153 = dma.done [#allocation11], 4096
    $region81: #{actor_forward.1} parent=1 // pred_fallthru
      _
    // Predicated region
    $region82: #{actor_forward.1} parent=1 // pred_check
      _
    $region83: #{actor_forward.1} parent=1 // pred_check_branch
      %155 = sbr.rel (0) target = $region85
    $region84: #{actor_forward.1} parent=1 // pred_region
      %156 = dma.done [#allocation14], 2048
    $region85: #{actor_forward.1} parent=1 // pred_fallthru
      _
    // Predicated region
    $region86: #{actor_forward.1} parent=1 // pred_check
      _
    $region87: #{actor_forward.1} parent=1 // pred_check_branch
      %158 = sbr.rel (0) target = $region89
    $region88: #{actor_forward.1} parent=1 // pred_region
      %159 = dma.done [#allocation14], 1024
    $region89: #{actor_forward.1} parent=1 // pred_fallthru
      _
    %v161 = vld [vmem:[#allocation2] sm:$0x3]
    %v162 = vpack.c.bf16 %v161, %v161
    %v163 = vld [vmem:[#allocation4] sm:$0xff]
    %v164 = vld [vmem:[#allocation4 + $0x8] sm:$0xff]
    %v165 = vld [vmem:[#allocation4 + $0x10] sm:$0xff]
    %v166 = vld [vmem:[#allocation4 + $0x18] sm:$0xff]
    %v167 = vld [vmem:[#allocation4 + $0x20] sm:$0xff]
    %v168 = vld [vmem:[#allocation4 + $0x28] sm:$0xff]
    %v169 = vld [vmem:[#allocation4 + $0x30] sm:$0xff]
    %v170 = vld [vmem:[#allocation4 + $0x38] sm:$0xff]
    %v171 = vld [vmem:[#allocation6] ss:$4 sm:$0xf]
    %v173 = vlaneseq
    %v174 = vshrl.u32 %v173, 7
    %v175 = vsub.s32 0, %v174
    %v176 = vrot.slane %v171, %v175
    %v177 = vlaneseq
    %v178 = vshrl.u32 %v177, 7
    %v179 = vsub.s32 1, %v178
    %v180 = vrot.slane %v171, %v179
    %v181 = vlaneseq
    %v182 = vshrl.u32 %v181, 7
    %v183 = vsub.s32 2, %v182
    %v184 = vrot.slane %v171, %v183
    %v185 = vlaneseq
    %v186 = vshrl.u32 %v185, 7
    %v187 = vsub.s32 3, %v186
    %v188 = vrot.slane %v171, %v187
    %v201 = vunpack.c.l.b16 %v163
    %v202 = vunpack.c.h.b16 %v163
    %v203 = vunpack.c.l.b16 %v164
    %v204 = vunpack.c.h.b16 %v164
    %v205 = vunpack.c.l.b16 %v165
    %v206 = vunpack.c.h.b16 %v165
    %v207 = vunpack.c.l.b16 %v166
    %v208 = vunpack.c.h.b16 %v166
    %v209 = vunpack.c.l.b16 %v167
    %v210 = vunpack.c.h.b16 %v167
    %v211 = vunpack.c.l.b16 %v168
    %v212 = vunpack.c.h.b16 %v168
    %v213 = vunpack.c.l.b16 %v169
    %v214 = vunpack.c.h.b16 %v169
    %v215 = vunpack.c.l.b16 %v170
    %v216 = vunpack.c.h.b16 %v170
    %v217 = vpack.c.b16 %v205, %v201
    %v218 = vpack.c.b16 %v206, %v202
    %v219 = vpack.c.b16 %v207, %v203
    %v220 = vpack.c.b16 %v208, %v204
    %v221 = vpack.c.b16 %v213, %v209
    %v222 = vpack.c.b16 %v214, %v210
    %v223 = vpack.c.b16 %v215, %v211
    %v224 = vpack.c.b16 %v216, %v212
    %vm233 = vcmask 261120
    %v235 = vsel %vm233, %v162, 0
    %237 = vmatprep.subr.bf16.mxu0 %v218
    %238 = vmatpush1.bf16.msra.mxu0 %v217
    %239 = vmatprep.subr.bf16.mxu0 %v222
    %240 = vmatpush1.bf16.msra.mxu0 %v221
    %241 = vmatprep.subr.bf16.mxu0 0
    %242 = vmatpush1.bf16.msra.mxu0 0
    %243 = vmatprep.subr.bf16.mxu0 0
    %244 = vmatpush1.bf16.msra.mxu0 0
    %245 = vmatprep.subr.bf16.mxu0 0
    %246 = vmatpush1.bf16.msra.mxu0 0
    %247 = vmatprep.subr.bf16.mxu0 0
    %248 = vmatpush1.bf16.msra.mxu0 0
    %249 = vmatprep.subr.bf16.mxu0 0
    %250 = vmatpush1.bf16.msra.mxu0 0
    %251 = vmatprep.subr.bf16.mxu0 0
    %252 = vmatpush1.bf16.msra.mxu0 0
    %253 = vmatprep.subr.bf16.mxu0 0
    %254 = vmatpush1.bf16.msra.mxu0 0
    %255 = vmatprep.subr.bf16.mxu0 0
    %256 = vmatpush1.bf16.msra.mxu0 0
    %257 = vmatprep.subr.bf16.mxu0 0
    %258 = vmatpush1.bf16.msra.mxu0 0
    %259 = vmatprep.subr.bf16.mxu0 0
    %260 = vmatpush1.bf16.msra.mxu0 0
    %261 = vmatprep.subr.bf16.mxu0 0
    %262 = vmatpush1.bf16.msra.mxu0 0
    %263 = vmatprep.subr.bf16.mxu0 0
    %264 = vmatpush1.bf16.msra.mxu0 0
    %265 = vmatprep.subr.bf16.mxu0 0
    %266 = vmatpush1.bf16.msra.mxu0 0
    %267 = vmatprep.subr.bf16.mxu0 0
    %268 = vmatpush1.bf16.msra.mxu0 0
    %269 = vmatprep.mubr.bf16.mxu0 0
    %270 = vmatmul.mubr.bf16.gmra.mrb[0].mxu0 %v235
    %v271 = vpop.f32.mrb[0].mxu0
    %v272 = vadd.f32 %v176, %v271
    %v273 = vpop.f32.mrb[0].mxu0
    %v274 = vadd.f32 %v180, %v273
    %v275 = vpop.f32.mrb[0].mxu0
    %v276 = vpop.f32.mrb[0].mxu0
    %277 = vdwg.mxu0
    %278 = vmatprep.subr.bf16.mxu0 %v220
    %279 = vmatpush1.bf16.msra.mxu0 %v219
    %280 = vmatprep.subr.bf16.mxu0 %v224
    %281 = vmatpush1.bf16.msra.mxu0 %v223
    %282 = vmatprep.subr.bf16.mxu0 0
    %283 = vmatpush1.bf16.msra.mxu0 0
    %284 = vmatprep.subr.bf16.mxu0 0
    %285 = vmatpush1.bf16.msra.mxu0 0
    %286 = vmatprep.subr.bf16.mxu0 0
    %287 = vmatpush1.bf16.msra.mxu0 0
    %288 = vmatprep.subr.bf16.mxu0 0
    %289 = vmatpush1.bf16.msra.mxu0 0
    %290 = vmatprep.subr.bf16.mxu0 0
    %291 = vmatpush1.bf16.msra.mxu0 0
    %292 = vmatprep.subr.bf16.mxu0 0
    %293 = vmatpush1.bf16.msra.mxu0 0
    %294 = vmatprep.subr.bf16.mxu0 0
    %295 = vmatpush1.bf16.msra.mxu0 0
    %296 = vmatprep.subr.bf16.mxu0 0
    %297 = vmatpush1.bf16.msra.mxu0 0
    %298 = vmatprep.subr.bf16.mxu0 0
    %299 = vmatpush1.bf16.msra.mxu0 0
    %300 = vmatprep.subr.bf16.mxu0 0
    %301 = vmatpush1.bf16.msra.mxu0 0
    %302 = vmatprep.subr.bf16.mxu0 0
    %303 = vmatpush1.bf16.msra.mxu0 0
    %304 = vmatprep.subr.bf16.mxu0 0
    %305 = vmatpush1.bf16.msra.mxu0 0
    %306 = vmatprep.subr.bf16.mxu0 0
    %307 = vmatpush1.bf16.msra.mxu0 0
    %308 = vmatprep.subr.bf16.mxu0 0
    %309 = vmatpush1.bf16.msra.mxu0 0
    %310 = vmatprep.mubr.bf16.mxu0 0
    %311 = vmatmul.mubr.bf16.gmra.mrb[0].mxu0 %v235
    %v312 = vpop.f32.mrb[0].mxu0
    %v313 = vadd.f32 %v184, %v312
    %v314 = vpop.f32.mrb[0].mxu0
    %v315 = vadd.f32 %v188, %v314
    %v316 = vpop.f32.mrb[0].mxu0
    %v317 = vpop.f32.mrb[0].mxu0
    %318 = vdwg.mxu0
    %v319 = vmax.f32 %v272, 0.0
    %v320 = vmax.f32 %v274, 0.0
    %v321 = vmax.f32 %v313, 0.0
    %v322 = vmax.f32 %v315, 0.0
    %vm323 = vcmask 1041408
    %v324 = vsel %vm323, %v319, 0.0
    %v325 = vsel %vm323, %v320, 0.0
    %v326 = vadd.f32 %v324, %v325
    %v327 = vsel %vm323, %v321, 0.0
    %v328 = vadd.f32 %v326, %v327
    %v329 = vsel %vm323, %v322, 0.0
    %v330 = vadd.f32 %v328, %v329
    %331 = vadd.xlane.f32.xlu0 %v330
    %v332 = vpop.xlane.xlu0 %331
    %v333 = vrcp.pop 512.0
    %v334 = vmul.f32 %v332, %v333
    %v335 = vmul.f32 %v319, %v319
    %v336 = vmul.f32 %v320, %v320
    %v337 = vmul.f32 %v321, %v321
    %v338 = vmul.f32 %v322, %v322
    %v339 = vsel %vm323, %v335, 0.0
    %v340 = vsel %vm323, %v336, 0.0
    %v341 = vadd.f32 %v339, %v340
    %v342 = vsel %vm323, %v337, 0.0
    %v343 = vadd.f32 %v341, %v342
    %v344 = vsel %vm323, %v338, 0.0
    %v345 = vadd.f32 %v343, %v344
    %346 = vadd.xlane.f32.xlu0 %v345
    %v347 = vpop.xlane.xlu0 %346
    %v348 = vmul.f32 %v347, %v333
    %v349 = vmul.f32 %v334, %v334
    %v350 = vsub.f32 %v348, %v349
    %v351 = vmax.f32 %v350, 0.0
    %v352 = vsub.f32 %v319, %v334
    %v353 = vsub.f32 %v320, %v334
    %v354 = vsub.f32 %v321, %v334
    %v355 = vsub.f32 %v322, %v334
    %v356 = vadd.f32 %v351, 1e-05
    %v357 = vrsqrt.pop %v356
    %v358 = vmul.f32 %v352, %v357
    %v359 = vmul.f32 %v353, %v357
    %v360 = vmul.f32 %v354, %v357
    %v361 = vmul.f32 %v355, %v357
    %s362 = scalar_lea.vmem [#allocation6], 1
    %v363 = vld [vmem:[%s362] ss:$4 sm:$0xf]
    %v365 = vlaneseq
    %v366 = vshrl.u32 %v365, 7
    %v367 = vsub.s32 0, %v366
    %v368 = vrot.slane %v363, %v367
    %v369 = vlaneseq
    %v370 = vshrl.u32 %v369, 7
    %v371 = vsub.s32 1, %v370
    %v372 = vrot.slane %v363, %v371
    %v373 = vlaneseq
    %v374 = vshrl.u32 %v373, 7
    %v375 = vsub.s32 2, %v374
    %v376 = vrot.slane %v363, %v375
    %v377 = vlaneseq
    %v378 = vshrl.u32 %v377, 7
    %v379 = vsub.s32 3, %v378
    %v380 = vrot.slane %v363, %v379
    %v385 = vmul.f32 %v358, %v368
    %v386 = vmul.f32 %v359, %v372
    %v387 = vmul.f32 %v360, %v376
    %v388 = vmul.f32 %v361, %v380
    %s389 = scalar_lea.vmem [#allocation6], 2
    %v390 = vld [vmem:[%s389] ss:$4 sm:$0xf]
    %v392 = vlaneseq
    %v393 = vshrl.u32 %v392, 7
    %v394 = vsub.s32 0, %v393
    %v395 = vrot.slane %v390, %v394
    %v396 = vlaneseq
    %v397 = vshrl.u32 %v396, 7
    %v398 = vsub.s32 1, %v397
    %v399 = vrot.slane %v390, %v398
    %v400 = vlaneseq
    %v401 = vshrl.u32 %v400, 7
    %v402 = vsub.s32 2, %v401
    %v403 = vrot.slane %v390, %v402
    %v404 = vlaneseq
    %v405 = vshrl.u32 %v404, 7
    %v406 = vsub.s32 3, %v405
    %v407 = vrot.slane %v390, %v406
    %v412 = vadd.f32 %v385, %v395
    %v413 = vadd.f32 %v386, %v399
    %v414 = vadd.f32 %v387, %v403
    %v415 = vadd.f32 %v388, %v407
    %v416 = vpack.c.bf16 %v412, %v412
    %v417 = vpack.c.bf16 %v413, %v413
    %v418 = vpack.c.bf16 %v414, %v414
    %v419 = vpack.c.bf16 %v415, %v415
    %v420 = vld [vmem:[#allocation7] sm:$0xff]
    %v421 = vld [vmem:[#allocation7 + $0x8] sm:$0xff]
    %v422 = vld [vmem:[#allocation7 + $0x10] sm:$0xff]
    %v423 = vld [vmem:[#allocation7 + $0x18] sm:$0xff]
    %v424 = vld [vmem:[#allocation7 + $0x20] sm:$0xff]
    %v425 = vld [vmem:[#allocation7 + $0x28] sm:$0xff]
    %v426 = vld [vmem:[#allocation7 + $0x30] sm:$0xff]
    %v427 = vld [vmem:[#allocation7 + $0x38] sm:$0xff]
    %v428 = vld [vmem:[#allocation7 + $0x40] sm:$0xff]
    %v429 = vld [vmem:[#allocation7 + $0x48] sm:$0xff]
    %v430 = vld [vmem:[#allocation7 + $0x50] sm:$0xff]
    %v431 = vld [vmem:[#allocation7 + $0x58] sm:$0xff]
    %v432 = vld [vmem:[#allocation7 + $0x60] sm:$0xff]
    %v433 = vld [vmem:[#allocation7 + $0x68] sm:$0xff]
    %v434 = vld [vmem:[#allocation7 + $0x70] sm:$0xff]
    %v435 = vld [vmem:[#allocation7 + $0x78] sm:$0xff]
    %v436 = vld [vmem:[#allocation7 + $0x80] sm:$0xff]
    %v437 = vld [vmem:[#allocation7 + $0x88] sm:$0xff]
    %v438 = vld [vmem:[#allocation7 + $0x90] sm:$0xff]
    %v439 = vld [vmem:[#allocation7 + $0x98] sm:$0xff]
    %v440 = vld [vmem:[#allocation7 + $0xa0] sm:$0xff]
    %v441 = vld [vmem:[#allocation7 + $0xa8] sm:$0xff]
    %v442 = vld [vmem:[#allocation7 + $0xb0] sm:$0xff]
    %v443 = vld [vmem:[#allocation7 + $0xb8] sm:$0xff]
    %v444 = vld [vmem:[#allocation7 + $0xc0] sm:$0xff]
    %v445 = vld [vmem:[#allocation7 + $0xc8] sm:$0xff]
    %v446 = vld [vmem:[#allocation7 + $0xd0] sm:$0xff]
    %v447 = vld [vmem:[#allocation7 + $0xd8] sm:$0xff]
    %v448 = vld [vmem:[#allocation7 + $0xe0] sm:$0xff]
    %v449 = vld [vmem:[#allocation7 + $0xe8] sm:$0xff]
    %v450 = vld [vmem:[#allocation7 + $0xf0] sm:$0xff]
    %v451 = vld [vmem:[#allocation7 + $0xf8] sm:$0xff]
    %v452 = vld [vmem:[#allocation7 + $0x100] sm:$0xff]
    %v453 = vld [vmem:[#allocation7 + $0x108] sm:$0xff]
    %v454 = vld [vmem:[#allocation7 + $0x110] sm:$0xff]
    %v455 = vld [vmem:[#allocation7 + $0x118] sm:$0xff]
    %v456 = vld [vmem:[#allocation7 + $0x120] sm:$0xff]
    %v457 = vld [vmem:[#allocation7 + $0x128] sm:$0xff]
    %v458 = vld [vmem:[#allocation7 + $0x130] sm:$0xff]
    %v459 = vld [vmem:[#allocation7 + $0x138] sm:$0xff]
    %v460 = vld [vmem:[#allocation7 + $0x140] sm:$0xff]
    %v461 = vld [vmem:[#allocation7 + $0x148] sm:$0xff]
    %v462 = vld [vmem:[#allocation7 + $0x150] sm:$0xff]
    %v463 = vld [vmem:[#allocation7 + $0x158] sm:$0xff]
    %v464 = vld [vmem:[#allocation7 + $0x160] sm:$0xff]
    %v465 = vld [vmem:[#allocation7 + $0x168] sm:$0xff]
    %v466 = vld [vmem:[#allocation7 + $0x170] sm:$0xff]
    %v467 = vld [vmem:[#allocation7 + $0x178] sm:$0xff]
    %v468 = vld [vmem:[#allocation7 + $0x180] sm:$0xff]
    %v469 = vld [vmem:[#allocation7 + $0x188] sm:$0xff]
    %v470 = vld [vmem:[#allocation7 + $0x190] sm:$0xff]
    %v471 = vld [vmem:[#allocation7 + $0x198] sm:$0xff]
    %v472 = vld [vmem:[#allocation7 + $0x1a0] sm:$0xff]
    %v473 = vld [vmem:[#allocation7 + $0x1a8] sm:$0xff]
    %v474 = vld [vmem:[#allocation7 + $0x1b0] sm:$0xff]
    %v475 = vld [vmem:[#allocation7 + $0x1b8] sm:$0xff]
    %v476 = vld [vmem:[#allocation7 + $0x1c0] sm:$0xff]
    %v477 = vld [vmem:[#allocation7 + $0x1c8] sm:$0xff]
    %v478 = vld [vmem:[#allocation7 + $0x1d0] sm:$0xff]
    %v479 = vld [vmem:[#allocation7 + $0x1d8] sm:$0xff]
    %v480 = vld [vmem:[#allocation7 + $0x1e0] sm:$0xff]
    %v481 = vld [vmem:[#allocation7 + $0x1e8] sm:$0xff]
    %v482 = vld [vmem:[#allocation7 + $0x1f0] sm:$0xff]
    %v483 = vld [vmem:[#allocation7 + $0x1f8] sm:$0xff]
    %v484 = vld [vmem:[#allocation7 + $0x200] sm:$0xff]
    %v485 = vld [vmem:[#allocation7 + $0x208] sm:$0xff]
    %v486 = vld [vmem:[#allocation7 + $0x210] sm:$0xff]
    %v487 = vld [vmem:[#allocation7 + $0x218] sm:$0xff]
    %v488 = vld [vmem:[#allocation7 + $0x220] sm:$0xff]
    %v489 = vld [vmem:[#allocation7 + $0x228] sm:$0xff]
    %v490 = vld [vmem:[#allocation7 + $0x230] sm:$0xff]
    %v491 = vld [vmem:[#allocation7 + $0x238] sm:$0xff]
    %v492 = vld [vmem:[#allocation7 + $0x240] sm:$0xff]
    %v493 = vld [vmem:[#allocation7 + $0x248] sm:$0xff]
    %v494 = vld [vmem:[#allocation7 + $0x250] sm:$0xff]
    %v495 = vld [vmem:[#allocation7 + $0x258] sm:$0xff]
    %v496 = vld [vmem:[#allocation7 + $0x260] sm:$0xff]
    %v497 = vld [vmem:[#allocation7 + $0x268] sm:$0xff]
    %v498 = vld [vmem:[#allocation7 + $0x270] sm:$0xff]
    %v499 = vld [vmem:[#allocation7 + $0x278] sm:$0xff]
    %v500 = vld [vmem:[#allocation7 + $0x280] sm:$0xff]
    %v501 = vld [vmem:[#allocation7 + $0x288] sm:$0xff]
    %v502 = vld [vmem:[#allocation7 + $0x290] sm:$0xff]
    %v503 = vld [vmem:[#allocation7 + $0x298] sm:$0xff]
    %v504 = vld [vmem:[#allocation7 + $0x2a0] sm:$0xff]
    %v505 = vld [vmem:[#allocation7 + $0x2a8] sm:$0xff]
    %v506 = vld [vmem:[#allocation7 + $0x2b0] sm:$0xff]
    %v507 = vld [vmem:[#allocation7 + $0x2b8] sm:$0xff]
    %v508 = vld [vmem:[#allocation7 + $0x2c0] sm:$0xff]
    %v509 = vld [vmem:[#allocation7 + $0x2c8] sm:$0xff]
    %v510 = vld [vmem:[#allocation7 + $0x2d0] sm:$0xff]
    %v511 = vld [vmem:[#allocation7 + $0x2d8] sm:$0xff]
    %v512 = vld [vmem:[#allocation7 + $0x2e0] sm:$0xff]
    %v513 = vld [vmem:[#allocation7 + $0x2e8] sm:$0xff]
    %v514 = vld [vmem:[#allocation7 + $0x2f0] sm:$0xff]
    %v515 = vld [vmem:[#allocation7 + $0x2f8] sm:$0xff]
    %v516 = vld [vmem:[#allocation7 + $0x300] sm:$0xff]
    %v517 = vld [vmem:[#allocation7 + $0x308] sm:$0xff]
    %v518 = vld [vmem:[#allocation7 + $0x310] sm:$0xff]
    %v519 = vld [vmem:[#allocation7 + $0x318] sm:$0xff]
    %v520 = vld [vmem:[#allocation7 + $0x320] sm:$0xff]
    %v521 = vld [vmem:[#allocation7 + $0x328] sm:$0xff]
    %v522 = vld [vmem:[#allocation7 + $0x330] sm:$0xff]
    %v523 = vld [vmem:[#allocation7 + $0x338] sm:$0xff]
    %v524 = vld [vmem:[#allocation7 + $0x340] sm:$0xff]
    %v525 = vld [vmem:[#allocation7 + $0x348] sm:$0xff]
    %v526 = vld [vmem:[#allocation7 + $0x350] sm:$0xff]
    %v527 = vld [vmem:[#allocation7 + $0x358] sm:$0xff]
    %v528 = vld [vmem:[#allocation7 + $0x360] sm:$0xff]
    %v529 = vld [vmem:[#allocation7 + $0x368] sm:$0xff]
    %v530 = vld [vmem:[#allocation7 + $0x370] sm:$0xff]
    %v531 = vld [vmem:[#allocation7 + $0x378] sm:$0xff]
    %v532 = vld [vmem:[#allocation7 + $0x380] sm:$0xff]
    %v533 = vld [vmem:[#allocation7 + $0x388] sm:$0xff]
    %v534 = vld [vmem:[#allocation7 + $0x390] sm:$0xff]
    %v535 = vld [vmem:[#allocation7 + $0x398] sm:$0xff]
    %v536 = vld [vmem:[#allocation7 + $0x3a0] sm:$0xff]
    %v537 = vld [vmem:[#allocation7 + $0x3a8] sm:$0xff]
    %v538 = vld [vmem:[#allocation7 + $0x3b0] sm:$0xff]
    %v539 = vld [vmem:[#allocation7 + $0x3b8] sm:$0xff]
    %v540 = vld [vmem:[#allocation7 + $0x3c0] sm:$0xff]
    %v541 = vld [vmem:[#allocation7 + $0x3c8] sm:$0xff]
    %v542 = vld [vmem:[#allocation7 + $0x3d0] sm:$0xff]
    %v543 = vld [vmem:[#allocation7 + $0x3d8] sm:$0xff]
    %v544 = vld [vmem:[#allocation7 + $0x3e0] sm:$0xff]
    %v545 = vld [vmem:[#allocation7 + $0x3e8] sm:$0xff]
    %v546 = vld [vmem:[#allocation7 + $0x3f0] sm:$0xff]
    %v547 = vld [vmem:[#allocation7 + $0x3f8] sm:$0xff]
    %v548 = vld [vmem:[#allocation9] ss:$4 sm:$0xf]
    %v550 = vlaneseq
    %v551 = vshrl.u32 %v550, 7
    %v552 = vsub.s32 0, %v551
    %v553 = vrot.slane %v548, %v552
    %v554 = vlaneseq
    %v555 = vshrl.u32 %v554, 7
    %v556 = vsub.s32 1, %v555
    %v557 = vrot.slane %v548, %v556
    %v558 = vlaneseq
    %v559 = vshrl.u32 %v558, 7
    %v560 = vsub.s32 2, %v559
    %v561 = vrot.slane %v548, %v560
    %v562 = vlaneseq
    %v563 = vshrl.u32 %v562, 7
    %v564 = vsub.s32 3, %v563
    %v565 = vrot.slane %v548, %v564
    %v698 = vunpack.c.l.b16 %v420
    %v699 = vunpack.c.h.b16 %v420
    %v700 = vunpack.c.l.b16 %v421
    %v701 = vunpack.c.h.b16 %v421
    %v702 = vunpack.c.l.b16 %v422
    %v703 = vunpack.c.h.b16 %v422
    %v704 = vunpack.c.l.b16 %v423
    %v705 = vunpack.c.h.b16 %v423
    %v706 = vunpack.c.l.b16 %v424
    %v707 = vunpack.c.h.b16 %v424
    %v708 = vunpack.c.l.b16 %v425
    %v709 = vunpack.c.h.b16 %v425
    %v710 = vunpack.c.l.b16 %v426
    %v711 = vunpack.c.h.b16 %v426
    %v712 = vunpack.c.l.b16 %v427
    %v713 = vunpack.c.h.b16 %v427
    %v714 = vunpack.c.l.b16 %v428
    %v715 = vunpack.c.h.b16 %v428
    %v716 = vunpack.c.l.b16 %v429
    %v717 = vunpack.c.h.b16 %v429
    %v718 = vunpack.c.l.b16 %v430
    %v719 = vunpack.c.h.b16 %v430
    %v720 = vunpack.c.l.b16 %v431
    %v721 = vunpack.c.h.b16 %v431
    %v722 = vunpack.c.l.b16 %v432
    %v723 = vunpack.c.h.b16 %v432
    %v724 = vunpack.c.l.b16 %v433
    %v725 = vunpack.c.h.b16 %v433
    %v726 = vunpack.c.l.b16 %v434
    %v727 = vunpack.c.h.b16 %v434
    %v728 = vunpack.c.l.b16 %v435
    %v729 = vunpack.c.h.b16 %v435
    %v730 = vunpack.c.l.b16 %v436
    %v731 = vunpack.c.h.b16 %v436
    %v732 = vunpack.c.l.b16 %v437
    %v733 = vunpack.c.h.b16 %v437
    %v734 = vunpack.c.l.b16 %v438
    %v735 = vunpack.c.h.b16 %v438
    %v736 = vunpack.c.l.b16 %v439
    %v737 = vunpack.c.h.b16 %v439
    %v738 = vunpack.c.l.b16 %v440
    %v739 = vunpack.c.h.b16 %v440
    %v740 = vunpack.c.l.b16 %v441
    %v741 = vunpack.c.h.b16 %v441
    %v742 = vunpack.c.l.b16 %v442
    %v743 = vunpack.c.h.b16 %v442
    %v744 = vunpack.c.l.b16 %v443
    %v745 = vunpack.c.h.b16 %v443
    %v746 = vunpack.c.l.b16 %v444
    %v747 = vunpack.c.h.b16 %v444
    %v748 = vunpack.c.l.b16 %v445
    %v749 = vunpack.c.h.b16 %v445
    %v750 = vunpack.c.l.b16 %v446
    %v751 = vunpack.c.h.b16 %v446
    %v752 = vunpack.c.l.b16 %v447
    %v753 = vunpack.c.h.b16 %v447
    %v754 = vunpack.c.l.b16 %v448
    %v755 = vunpack.c.h.b16 %v448
    %v756 = vunpack.c.l.b16 %v449
    %v757 = vunpack.c.h.b16 %v449
    %v758 = vunpack.c.l.b16 %v450
    %v759 = vunpack.c.h.b16 %v450
    %v760 = vunpack.c.l.b16 %v451
    %v761 = vunpack.c.h.b16 %v451
    %v762 = vunpack.c.l.b16 %v452
    %v763 = vunpack.c.h.b16 %v452
    %v764 = vunpack.c.l.b16 %v453
    %v765 = vunpack.c.h.b16 %v453
    %v766 = vunpack.c.l.b16 %v454
    %v767 = vunpack.c.h.b16 %v454
    %v768 = vunpack.c.l.b16 %v455
    %v769 = vunpack.c.h.b16 %v455
    %v770 = vunpack.c.l.b16 %v456
    %v771 = vunpack.c.h.b16 %v456
    %v772 = vunpack.c.l.b16 %v457
    %v773 = vunpack.c.h.b16 %v457
    %v774 = vunpack.c.l.b16 %v458
    %v775 = vunpack.c.h.b16 %v458
    %v776 = vunpack.c.l.b16 %v459
    %v777 = vunpack.c.h.b16 %v459
    %v778 = vunpack.c.l.b16 %v460
    %v779 = vunpack.c.h.b16 %v460
    %v780 = vunpack.c.l.b16 %v461
    %v781 = vunpack.c.h.b16 %v461
    %v782 = vunpack.c.l.b16 %v462
    %v783 = vunpack.c.h.b16 %v462
    %v784 = vunpack.c.l.b16 %v463
    %v785 = vunpack.c.h.b16 %v463
    %v786 = vunpack.c.l.b16 %v464
    %v787 = vunpack.c.h.b16 %v464
    %v788 = vunpack.c.l.b16 %v465
    %v789 = vunpack.c.h.b16 %v465
    %v790 = vunpack.c.l.b16 %v466
    %v791 = vunpack.c.h.b16 %v466
    %v792 = vunpack.c.l.b16 %v467
    %v793 = vunpack.c.h.b16 %v467
    %v794 = vunpack.c.l.b16 %v468
    %v795 = vunpack.c.h.b16 %v468
    %v796 = vunpack.c.l.b16 %v469
    %v797 = vunpack.c.h.b16 %v469
    %v798 = vunpack.c.l.b16 %v470
    %v799 = vunpack.c.h.b16 %v470
    %v800 = vunpack.c.l.b16 %v471
    %v801 = vunpack.c.h.b16 %v471
    %v802 = vunpack.c.l.b16 %v472
    %v803 = vunpack.c.h.b16 %v472
    %v804 = vunpack.c.l.b16 %v473
    %v805 = vunpack.c.h.b16 %v473
    %v806 = vunpack.c.l.b16 %v474
    %v807 = vunpack.c.h.b16 %v474
    %v808 = vunpack.c.l.b16 %v475
    %v809 = vunpack.c.h.b16 %v475
    %v810 = vunpack.c.l.b16 %v476
    %v811 = vunpack.c.h.b16 %v476
    %v812 = vunpack.c.l.b16 %v477
    %v813 = vunpack.c.h.b16 %v477
    %v814 = vunpack.c.l.b16 %v478
    %v815 = vunpack.c.h.b16 %v478
    %v816 = vunpack.c.l.b16 %v479
    %v817 = vunpack.c.h.b16 %v479
    %v818 = vunpack.c.l.b16 %v480
    %v819 = vunpack.c.h.b16 %v480
    %v820 = vunpack.c.l.b16 %v481
    %v821 = vunpack.c.h.b16 %v481
    %v822 = vunpack.c.l.b16 %v482
    %v823 = vunpack.c.h.b16 %v482
    %v824 = vunpack.c.l.b16 %v483
    %v825 = vunpack.c.h.b16 %v483
    %v826 = vunpack.c.l.b16 %v484
    %v827 = vunpack.c.h.b16 %v484
    %v828 = vunpack.c.l.b16 %v485
    %v829 = vunpack.c.h.b16 %v485
    %v830 = vunpack.c.l.b16 %v486
    %v831 = vunpack.c.h.b16 %v486
    %v832 = vunpack.c.l.b16 %v487
    %v833 = vunpack.c.h.b16 %v487
    %v834 = vunpack.c.l.b16 %v488
    %v835 = vunpack.c.h.b16 %v488
    %v836 = vunpack.c.l.b16 %v489
    %v837 = vunpack.c.h.b16 %v489
    %v838 = vunpack.c.l.b16 %v490
    %v839 = vunpack.c.h.b16 %v490
    %v840 = vunpack.c.l.b16 %v491
    %v841 = vunpack.c.h.b16 %v491
    %v842 = vunpack.c.l.b16 %v492
    %v843 = vunpack.c.h.b16 %v492
    %v844 = vunpack.c.l.b16 %v493
    %v845 = vunpack.c.h.b16 %v493
    %v846 = vunpack.c.l.b16 %v494
    %v847 = vunpack.c.h.b16 %v494
    %v848 = vunpack.c.l.b16 %v495
    %v849 = vunpack.c.h.b16 %v495
    %v850 = vunpack.c.l.b16 %v496
    %v851 = vunpack.c.h.b16 %v496
    %v852 = vunpack.c.l.b16 %v497
    %v853 = vunpack.c.h.b16 %v497
    %v854 = vunpack.c.l.b16 %v498
    %v855 = vunpack.c.h.b16 %v498
    %v856 = vunpack.c.l.b16 %v499
    %v857 = vunpack.c.h.b16 %v499
    %v858 = vunpack.c.l.b16 %v500
    %v859 = vunpack.c.h.b16 %v500
    %v860 = vunpack.c.l.b16 %v501
    %v861 = vunpack.c.h.b16 %v501
    %v862 = vunpack.c.l.b16 %v502
    %v863 = vunpack.c.h.b16 %v502
    %v864 = vunpack.c.l.b16 %v503
    %v865 = vunpack.c.h.b16 %v503
    %v866 = vunpack.c.l.b16 %v504
    %v867 = vunpack.c.h.b16 %v504
    %v868 = vunpack.c.l.b16 %v505
    %v869 = vunpack.c.h.b16 %v505
    %v870 = vunpack.c.l.b16 %v506
    %v871 = vunpack.c.h.b16 %v506
    %v872 = vunpack.c.l.b16 %v507
    %v873 = vunpack.c.h.b16 %v507
    %v874 = vunpack.c.l.b16 %v508
    %v875 = vunpack.c.h.b16 %v508
    %v876 = vunpack.c.l.b16 %v509
    %v877 = vunpack.c.h.b16 %v509
    %v878 = vunpack.c.l.b16 %v510
    %v879 = vunpack.c.h.b16 %v510
    %v880 = vunpack.c.l.b16 %v511
    %v881 = vunpack.c.h.b16 %v511
    %v882 = vunpack.c.l.b16 %v512
    %v883 = vunpack.c.h.b16 %v512
    %v884 = vunpack.c.l.b16 %v513
    %v885 = vunpack.c.h.b16 %v513
    %v886 = vunpack.c.l.b16 %v514
    %v887 = vunpack.c.h.b16 %v514
    %v888 = vunpack.c.l.b16 %v515
    %v889 = vunpack.c.h.b16 %v515
    %v890 = vunpack.c.l.b16 %v516
    %v891 = vunpack.c.h.b16 %v516
    %v892 = vunpack.c.l.b16 %v517
    %v893 = vunpack.c.h.b16 %v517
    %v894 = vunpack.c.l.b16 %v518
    %v895 = vunpack.c.h.b16 %v518
    %v896 = vunpack.c.l.b16 %v519
    %v897 = vunpack.c.h.b16 %v519
    %v898 = vunpack.c.l.b16 %v520
    %v899 = vunpack.c.h.b16 %v520
    %v900 = vunpack.c.l.b16 %v521
    %v901 = vunpack.c.h.b16 %v521
    %v902 = vunpack.c.l.b16 %v522
    %v903 = vunpack.c.h.b16 %v522
    %v904 = vunpack.c.l.b16 %v523
    %v905 = vunpack.c.h.b16 %v523
    %v906 = vunpack.c.l.b16 %v524
    %v907 = vunpack.c.h.b16 %v524
    %v908 = vunpack.c.l.b16 %v525
    %v909 = vunpack.c.h.b16 %v525
    %v910 = vunpack.c.l.b16 %v526
    %v911 = vunpack.c.h.b16 %v526
    %v912 = vunpack.c.l.b16 %v527
    %v913 = vunpack.c.h.b16 %v527
    %v914 = vunpack.c.l.b16 %v528
    %v915 = vunpack.c.h.b16 %v528
    %v916 = vunpack.c.l.b16 %v529
    %v917 = vunpack.c.h.b16 %v529
    %v918 = vunpack.c.l.b16 %v530
    %v919 = vunpack.c.h.b16 %v530
    %v920 = vunpack.c.l.b16 %v531
    %v921 = vunpack.c.h.b16 %v531
    %v922 = vunpack.c.l.b16 %v532
    %v923 = vunpack.c.h.b16 %v532
    %v924 = vunpack.c.l.b16 %v533
    %v925 = vunpack.c.h.b16 %v533
    %v926 = vunpack.c.l.b16 %v534
    %v927 = vunpack.c.h.b16 %v534
    %v928 = vunpack.c.l.b16 %v535
    %v929 = vunpack.c.h.b16 %v535
    %v930 = vunpack.c.l.b16 %v536
    %v931 = vunpack.c.h.b16 %v536
    %v932 = vunpack.c.l.b16 %v537
    %v933 = vunpack.c.h.b16 %v537
    %v934 = vunpack.c.l.b16 %v538
    %v935 = vunpack.c.h.b16 %v538
    %v936 = vunpack.c.l.b16 %v539
    %v937 = vunpack.c.h.b16 %v539
    %v938 = vunpack.c.l.b16 %v540
    %v939 = vunpack.c.h.b16 %v540
    %v940 = vunpack.c.l.b16 %v541
    %v941 = vunpack.c.h.b16 %v541
    %v942 = vunpack.c.l.b16 %v542
    %v943 = vunpack.c.h.b16 %v542
    %v944 = vunpack.c.l.b16 %v543
    %v945 = vunpack.c.h.b16 %v543
    %v946 = vunpack.c.l.b16 %v544
    %v947 = vunpack.c.h.b16 %v544
    %v948 = vunpack.c.l.b16 %v545
    %v949 = vunpack.c.h.b16 %v545
    %v950 = vunpack.c.l.b16 %v546
    %v951 = vunpack.c.h.b16 %v546
    %v952 = vunpack.c.l.b16 %v547
    %v953 = vunpack.c.h.b16 %v547
    %v954 = vpack.c.b16 %v702, %v698
    %v955 = vpack.c.b16 %v703, %v699
    %v956 = vpack.c.b16 %v704, %v700
    %v957 = vpack.c.b16 %v705, %v701
    %v958 = vpack.c.b16 %v710, %v706
    %v959 = vpack.c.b16 %v711, %v707
    %v960 = vpack.c.b16 %v712, %v708
    %v961 = vpack.c.b16 %v713, %v709
    %v962 = vpack.c.b16 %v718, %v714
    %v963 = vpack.c.b16 %v719, %v715
    %v964 = vpack.c.b16 %v720, %v716
    %v965 = vpack.c.b16 %v721, %v717
    %v966 = vpack.c.b16 %v726, %v722
    %v967 = vpack.c.b16 %v727, %v723
    %v968 = vpack.c.b16 %v728, %v724
    %v969 = vpack.c.b16 %v729, %v725
    %v970 = vpack.c.b16 %v734, %v730
    %v971 = vpack.c.b16 %v735, %v731
    %v972 = vpack.c.b16 %v736, %v732
    %v973 = vpack.c.b16 %v737, %v733
    %v974 = vpack.c.b16 %v742, %v738
    %v975 = vpack.c.b16 %v743, %v739
    %v976 = vpack.c.b16 %v744, %v740
    %v977 = vpack.c.b16 %v745, %v741
    %v978 = vpack.c.b16 %v750, %v746
    %v979 = vpack.c.b16 %v751, %v747
    %v980 = vpack.c.b16 %v752, %v748
    %v981 = vpack.c.b16 %v753, %v749
    %v982 = vpack.c.b16 %v758, %v754
    %v983 = vpack.c.b16 %v759, %v755
    %v984 = vpack.c.b16 %v760, %v756
    %v985 = vpack.c.b16 %v761, %v757
    %v986 = vpack.c.b16 %v766, %v762
    %v987 = vpack.c.b16 %v767, %v763
    %v988 = vpack.c.b16 %v768, %v764
    %v989 = vpack.c.b16 %v769, %v765
    %v990 = vpack.c.b16 %v774, %v770
    %v991 = vpack.c.b16 %v775, %v771
    %v992 = vpack.c.b16 %v776, %v772
    %v993 = vpack.c.b16 %v777, %v773
    %v994 = vpack.c.b16 %v782, %v778
    %v995 = vpack.c.b16 %v783, %v779
    %v996 = vpack.c.b16 %v784, %v780
    %v997 = vpack.c.b16 %v785, %v781
    %v998 = vpack.c.b16 %v790, %v786
    %v999 = vpack.c.b16 %v791, %v787
    %v1000 = vpack.c.b16 %v792, %v788
    %v1001 = vpack.c.b16 %v793, %v789
    %v1002 = vpack.c.b16 %v798, %v794
    %v1003 = vpack.c.b16 %v799, %v795
    %v1004 = vpack.c.b16 %v800, %v796
    %v1005 = vpack.c.b16 %v801, %v797
    %v1006 = vpack.c.b16 %v806, %v802
    %v1007 = vpack.c.b16 %v807, %v803
    %v1008 = vpack.c.b16 %v808, %v804
    %v1009 = vpack.c.b16 %v809, %v805
    %v1010 = vpack.c.b16 %v814, %v810
    %v1011 = vpack.c.b16 %v815, %v811
    %v1012 = vpack.c.b16 %v816, %v812
    %v1013 = vpack.c.b16 %v817, %v813
    %v1014 = vpack.c.b16 %v822, %v818
    %v1015 = vpack.c.b16 %v823, %v819
    %v1016 = vpack.c.b16 %v824, %v820
    %v1017 = vpack.c.b16 %v825, %v821
    %v1018 = vpack.c.b16 %v830, %v826
    %v1019 = vpack.c.b16 %v831, %v827
    %v1020 = vpack.c.b16 %v832, %v828
    %v1021 = vpack.c.b16 %v833, %v829
    %v1022 = vpack.c.b16 %v838, %v834
    %v1023 = vpack.c.b16 %v839, %v835
    %v1024 = vpack.c.b16 %v840, %v836
    %v1025 = vpack.c.b16 %v841, %v837
    %v1026 = vpack.c.b16 %v846, %v842
    %v1027 = vpack.c.b16 %v847, %v843
    %v1028 = vpack.c.b16 %v848, %v844
    %v1029 = vpack.c.b16 %v849, %v845
    %v1030 = vpack.c.b16 %v854, %v850
    %v1031 = vpack.c.b16 %v855, %v851
    %v1032 = vpack.c.b16 %v856, %v852
    %v1033 = vpack.c.b16 %v857, %v853
    %v1034 = vpack.c.b16 %v862, %v858
    %v1035 = vpack.c.b16 %v863, %v859
    %v1036 = vpack.c.b16 %v864, %v860
    %v1037 = vpack.c.b16 %v865, %v861
    %v1038 = vpack.c.b16 %v870, %v866
    %v1039 = vpack.c.b16 %v871, %v867
    %v1040 = vpack.c.b16 %v872, %v868
    %v1041 = vpack.c.b16 %v873, %v869
    %v1042 = vpack.c.b16 %v878, %v874
    %v1043 = vpack.c.b16 %v879, %v875
    %v1044 = vpack.c.b16 %v880, %v876
    %v1045 = vpack.c.b16 %v881, %v877
    %v1046 = vpack.c.b16 %v886, %v882
    %v1047 = vpack.c.b16 %v887, %v883
    %v1048 = vpack.c.b16 %v888, %v884
    %v1049 = vpack.c.b16 %v889, %v885
    %v1050 = vpack.c.b16 %v894, %v890
    %v1051 = vpack.c.b16 %v895, %v891
    %v1052 = vpack.c.b16 %v896, %v892
    %v1053 = vpack.c.b16 %v897, %v893
    %v1054 = vpack.c.b16 %v902, %v898
    %v1055 = vpack.c.b16 %v903, %v899
    %v1056 = vpack.c.b16 %v904, %v900
    %v1057 = vpack.c.b16 %v905, %v901
    %v1058 = vpack.c.b16 %v910, %v906
    %v1059 = vpack.c.b16 %v911, %v907
    %v1060 = vpack.c.b16 %v912, %v908
    %v1061 = vpack.c.b16 %v913, %v909
    %v1062 = vpack.c.b16 %v918, %v914
    %v1063 = vpack.c.b16 %v919, %v915
    %v1064 = vpack.c.b16 %v920, %v916
    %v1065 = vpack.c.b16 %v921, %v917
    %v1066 = vpack.c.b16 %v926, %v922
    %v1067 = vpack.c.b16 %v927, %v923
    %v1068 = vpack.c.b16 %v928, %v924
    %v1069 = vpack.c.b16 %v929, %v925
    %v1070 = vpack.c.b16 %v934, %v930
    %v1071 = vpack.c.b16 %v935, %v931
    %v1072 = vpack.c.b16 %v936, %v932
    %v1073 = vpack.c.b16 %v937, %v933
    %v1074 = vpack.c.b16 %v942, %v938
    %v1075 = vpack.c.b16 %v943, %v939
    %v1076 = vpack.c.b16 %v944, %v940
    %v1077 = vpack.c.b16 %v945, %v941
    %v1078 = vpack.c.b16 %v950, %v946
    %v1079 = vpack.c.b16 %v951, %v947
    %v1080 = vpack.c.b16 %v952, %v948
    %v1081 = vpack.c.b16 %v953, %v949
    %1210 = vmatprep.subr.bf16.mxu0 %v955
    %1211 = vmatpush1.bf16.msra.mxu0 %v954
    %1212 = vmatprep.subr.bf16.mxu0 %v959
    %1213 = vmatpush1.bf16.msra.mxu0 %v958
    %1214 = vmatprep.subr.bf16.mxu0 %v963
    %1215 = vmatpush1.bf16.msra.mxu0 %v962
    %1216 = vmatprep.subr.bf16.mxu0 %v967
    %1217 = vmatpush1.bf16.msra.mxu0 %v966
    %1218 = vmatprep.subr.bf16.mxu0 %v971
    %1219 = vmatpush1.bf16.msra.mxu0 %v970
    %1220 = vmatprep.subr.bf16.mxu0 %v975
    %1221 = vmatpush1.bf16.msra.mxu0 %v974
    %1222 = vmatprep.subr.bf16.mxu0 %v979
    %1223 = vmatpush1.bf16.msra.mxu0 %v978
    %1224 = vmatprep.subr.bf16.mxu0 %v983
    %1225 = vmatpush1.bf16.msra.mxu0 %v982
    %1226 = vmatprep.subr.bf16.mxu0 %v987
    %1227 = vmatpush1.bf16.msra.mxu0 %v986
    %1228 = vmatprep.subr.bf16.mxu0 %v991
    %1229 = vmatpush1.bf16.msra.mxu0 %v990
    %1230 = vmatprep.subr.bf16.mxu0 %v995
    %1231 = vmatpush1.bf16.msra.mxu0 %v994
    %1232 = vmatprep.subr.bf16.mxu0 %v999
    %1233 = vmatpush1.bf16.msra.mxu0 %v998
    %1234 = vmatprep.subr.bf16.mxu0 %v1003
    %1235 = vmatpush1.bf16.msra.mxu0 %v1002
    %1236 = vmatprep.subr.bf16.mxu0 %v1007
    %1237 = vmatpush1.bf16.msra.mxu0 %v1006
    %1238 = vmatprep.subr.bf16.mxu0 %v1011
    %1239 = vmatpush1.bf16.msra.mxu0 %v1010
    %1240 = vmatprep.subr.bf16.mxu0 %v1015
    %1241 = vmatpush1.bf16.msra.mxu0 %v1014
    %1242 = vmatprep.mubr.bf16.mxu0 %v417
    %1243 = vmatmul.mubr.bf16.gmra.mrb[0].mxu0 %v416
    %v1244 = vpop.f32.mrb[0].mxu0
    %v1245 = vadd.f32 %v553, %v1244
    %v1246 = vpop.f32.mrb[0].mxu0
    %v1247 = vadd.f32 %v557, %v1246
    %v1248 = vpop.f32.mrb[0].mxu0
    %v1249 = vpop.f32.mrb[0].mxu0
    %1250 = vdwg.mxu0
    %1251 = vmatprep.subr.bf16.mxu0 %v1019
    %1252 = vmatpush1.bf16.msra.mxu0 %v1018
    %1253 = vmatprep.subr.bf16.mxu0 %v1023
    %1254 = vmatpush1.bf16.msra.mxu0 %v1022
    %1255 = vmatprep.subr.bf16.mxu0 %v1027
    %1256 = vmatpush1.bf16.msra.mxu0 %v1026
    %1257 = vmatprep.subr.bf16.mxu0 %v1031
    %1258 = vmatpush1.bf16.msra.mxu0 %v1030
    %1259 = vmatprep.subr.bf16.mxu0 %v1035
    %1260 = vmatpush1.bf16.msra.mxu0 %v1034
    %1261 = vmatprep.subr.bf16.mxu0 %v1039
    %1262 = vmatpush1.bf16.msra.mxu0 %v1038
    %1263 = vmatprep.subr.bf16.mxu0 %v1043
    %1264 = vmatpush1.bf16.msra.mxu0 %v1042
    %1265 = vmatprep.subr.bf16.mxu0 %v1047
    %1266 = vmatpush1.bf16.msra.mxu0 %v1046
    %1267 = vmatprep.subr.bf16.mxu0 %v1051
    %1268 = vmatpush1.bf16.msra.mxu0 %v1050
    %1269 = vmatprep.subr.bf16.mxu0 %v1055
    %1270 = vmatpush1.bf16.msra.mxu0 %v1054
    %1271 = vmatprep.subr.bf16.mxu0 %v1059
    %1272 = vmatpush1.bf16.msra.mxu0 %v1058
    %1273 = vmatprep.subr.bf16.mxu0 %v1063
    %1274 = vmatpush1.bf16.msra.mxu0 %v1062
    %1275 = vmatprep.subr.bf16.mxu0 %v1067
    %1276 = vmatpush1.bf16.msra.mxu0 %v1066
    %1277 = vmatprep.subr.bf16.mxu0 %v1071
    %1278 = vmatpush1.bf16.msra.mxu0 %v1070
    %1279 = vmatprep.subr.bf16.mxu0 %v1075
    %1280 = vmatpush1.bf16.msra.mxu0 %v1074
    %1281 = vmatprep.subr.bf16.mxu0 %v1079
    %1282 = vmatpush1.bf16.msra.mxu0 %v1078
    %1283 = vmatprep.mubr.bf16.mxu0 %v419
    %1284 = vmatmul.mubr.bf16.gmra.mrb[0].mxu0 %v418
    %v1285 = vpop.f32.mrb[0].mxu0
    %v1286 = vadd.f32 %v1245, %v1285
    %v1287 = vpop.f32.mrb[0].mxu0
    %v1288 = vadd.f32 %v1247, %v1287
    %v1289 = vpop.f32.mrb[0].mxu0
    %v1290 = vpop.f32.mrb[0].mxu0
    %1291 = vdwg.mxu0
    %1292 = vmatprep.subr.bf16.mxu0 %v957
    %1293 = vmatpush1.bf16.msra.mxu0 %v956
    %1294 = vmatprep.subr.bf16.mxu0 %v961
    %1295 = vmatpush1.bf16.msra.mxu0 %v960
    %1296 = vmatprep.subr.bf16.mxu0 %v965
    %1297 = vmatpush1.bf16.msra.mxu0 %v964
    %1298 = vmatprep.subr.bf16.mxu0 %v969
    %1299 = vmatpush1.bf16.msra.mxu0 %v968
    %1300 = vmatprep.subr.bf16.mxu0 %v973
    %1301 = vmatpush1.bf16.msra.mxu0 %v972
    %1302 = vmatprep.subr.bf16.mxu0 %v977
    %1303 = vmatpush1.bf16.msra.mxu0 %v976
    %1304 = vmatprep.subr.bf16.mxu0 %v981
    %1305 = vmatpush1.bf16.msra.mxu0 %v980
    %1306 = vmatprep.subr.bf16.mxu0 %v985
    %1307 = vmatpush1.bf16.msra.mxu0 %v984
    %1308 = vmatprep.subr.bf16.mxu0 %v989
    %1309 = vmatpush1.bf16.msra.mxu0 %v988
    %1310 = vmatprep.subr.bf16.mxu0 %v993
    %1311 = vmatpush1.bf16.msra.mxu0 %v992
    %1312 = vmatprep.subr.bf16.mxu0 %v997
    %1313 = vmatpush1.bf16.msra.mxu0 %v996
    %1314 = vmatprep.subr.bf16.mxu0 %v1001
    %1315 = vmatpush1.bf16.msra.mxu0 %v1000
    %1316 = vmatprep.subr.bf16.mxu0 %v1005
    %1317 = vmatpush1.bf16.msra.mxu0 %v1004
    %1318 = vmatprep.subr.bf16.mxu0 %v1009
    %1319 = vmatpush1.bf16.msra.mxu0 %v1008
    %1320 = vmatprep.subr.bf16.mxu0 %v1013
    %1321 = vmatpush1.bf16.msra.mxu0 %v1012
    %1322 = vmatprep.subr.bf16.mxu0 %v1017
    %1323 = vmatpush1.bf16.msra.mxu0 %v1016
    %1324 = vmatprep.mubr.bf16.mxu0 %v417
    %1325 = vmatmul.mubr.bf16.gmra.mrb[0].mxu0 %v416
    %v1326 = vpop.f32.mrb[0].mxu0
    %v1327 = vadd.f32 %v561, %v1326
    %v1328 = vpop.f32.mrb[0].mxu0
    %v1329 = vadd.f32 %v565, %v1328
    %v1330 = vpop.f32.mrb[0].mxu0
    %v1331 = vpop.f32.mrb[0].mxu0
    %1332 = vdwg.mxu0
    %1333 = vmatprep.subr.bf16.mxu0 %v1021
    %1334 = vmatpush1.bf16.msra.mxu0 %v1020
    %1335 = vmatprep.subr.bf16.mxu0 %v1025
    %1336 = vmatpush1.bf16.msra.mxu0 %v1024
    %1337 = vmatprep.subr.bf16.mxu0 %v1029
    %1338 = vmatpush1.bf16.msra.mxu0 %v1028
    %1339 = vmatprep.subr.bf16.mxu0 %v1033
    %1340 = vmatpush1.bf16.msra.mxu0 %v1032
    %1341 = vmatprep.subr.bf16.mxu0 %v1037
    %1342 = vmatpush1.bf16.msra.mxu0 %v1036
    %1343 = vmatprep.subr.bf16.mxu0 %v1041
    %1344 = vmatpush1.bf16.msra.mxu0 %v1040
    %1345 = vmatprep.subr.bf16.mxu0 %v1045
    %1346 = vmatpush1.bf16.msra.mxu0 %v1044
    %1347 = vmatprep.subr.bf16.mxu0 %v1049
    %1348 = vmatpush1.bf16.msra.mxu0 %v1048
    %1349 = vmatprep.subr.bf16.mxu0 %v1053
    %1350 = vmatpush1.bf16.msra.mxu0 %v1052
    %1351 = vmatprep.subr.bf16.mxu0 %v1057
    %1352 = vmatpush1.bf16.msra.mxu0 %v1056
    %1353 = vmatprep.subr.bf16.mxu0 %v1061
    %1354 = vmatpush1.bf16.msra.mxu0 %v1060
    %1355 = vmatprep.subr.bf16.mxu0 %v1065
    %1356 = vmatpush1.bf16.msra.mxu0 %v1064
    %1357 = vmatprep.subr.bf16.mxu0 %v1069
    %1358 = vmatpush1.bf16.msra.mxu0 %v1068
    %1359 = vmatprep.subr.bf16.mxu0 %v1073
    %1360 = vmatpush1.bf16.msra.mxu0 %v1072
    %1361 = vmatprep.subr.bf16.mxu0 %v1077
    %1362 = vmatpush1.bf16.msra.mxu0 %v1076
    %1363 = vmatprep.subr.bf16.mxu0 %v1081
    %1364 = vmatpush1.bf16.msra.mxu0 %v1080
    %1365 = vmatprep.mubr.bf16.mxu0 %v419
    %1366 = vmatmul.mubr.bf16.gmra.mrb[0].mxu0 %v418
    %v1367 = vpop.f32.mrb[0].mxu0
    %v1368 = vadd.f32 %v1327, %v1367
    %v1369 = vpop.f32.mrb[0].mxu0
    %v1370 = vadd.f32 %v1329, %v1369
    %v1371 = vpop.f32.mrb[0].mxu0
    %v1372 = vpop.f32.mrb[0].mxu0
    %1373 = vdwg.mxu0
    %v1374 = vmax.f32 %v1286, 0.0
    %v1375 = vmax.f32 %v1288, 0.0
    %v1376 = vmax.f32 %v1368, 0.0
    %v1377 = vmax.f32 %v1370, 0.0
    %v1378 = vsel %vm323, %v1374, 0.0
    %v1379 = vsel %vm323, %v1375, 0.0
    %v1380 = vadd.f32 %v1378, %v1379
    %v1381 = vsel %vm323, %v1376, 0.0
    %v1382 = vadd.f32 %v1380, %v1381
    %v1383 = vsel %vm323, %v1377, 0.0
    %v1384 = vadd.f32 %v1382, %v1383
    %1385 = vadd.xlane.f32.xlu0 %v1384
    %v1386 = vpop.xlane.xlu0 %1385
    %v1387 = vmul.f32 %v1386, %v333
    %v1388 = vmul.f32 %v1374, %v1374
    %v1389 = vmul.f32 %v1375, %v1375
    %v1390 = vmul.f32 %v1376, %v1376
    %v1391 = vmul.f32 %v1377, %v1377
    %v1392 = vsel %vm323, %v1388, 0.0
    %v1393 = vsel %vm323, %v1389, 0.0
    %v1394 = vadd.f32 %v1392, %v1393
    %v1395 = vsel %vm323, %v1390, 0.0
    %v1396 = vadd.f32 %v1394, %v1395
    %v1397 = vsel %vm323, %v1391, 0.0
    %v1398 = vadd.f32 %v1396, %v1397
    %1399 = vadd.xlane.f32.xlu0 %v1398
    %v1400 = vpop.xlane.xlu0 %1399
    %v1401 = vmul.f32 %v1400, %v333
    %v1402 = vmul.f32 %v1387, %v1387
    %v1403 = vsub.f32 %v1401, %v1402
    %v1404 = vmax.f32 %v1403, 0.0
    %v1405 = vsub.f32 %v1374, %v1387
    %v1406 = vsub.f32 %v1375, %v1387
    %v1407 = vsub.f32 %v1376, %v1387
    %v1408 = vsub.f32 %v1377, %v1387
    %v1409 = vadd.f32 %v1404, 1e-05
    %v1410 = vrsqrt.pop %v1409
    %v1411 = vmul.f32 %v1405, %v1410
    %v1412 = vmul.f32 %v1406, %v1410
    %v1413 = vmul.f32 %v1407, %v1410
    %v1414 = vmul.f32 %v1408, %v1410
    %s1415 = scalar_lea.vmem [#allocation9], 1
    %v1416 = vld [vmem:[%s1415] ss:$4 sm:$0xf]
    %v1418 = vlaneseq
    %v1419 = vshrl.u32 %v1418, 7
    %v1420 = vsub.s32 0, %v1419
    %v1421 = vrot.slane %v1416, %v1420
    %v1422 = vlaneseq
    %v1423 = vshrl.u32 %v1422, 7
    %v1424 = vsub.s32 1, %v1423
    %v1425 = vrot.slane %v1416, %v1424
    %v1426 = vlaneseq
    %v1427 = vshrl.u32 %v1426, 7
    %v1428 = vsub.s32 2, %v1427
    %v1429 = vrot.slane %v1416, %v1428
    %v1430 = vlaneseq
    %v1431 = vshrl.u32 %v1430, 7
    %v1432 = vsub.s32 3, %v1431
    %v1433 = vrot.slane %v1416, %v1432
    %v1438 = vmul.f32 %v1411, %v1421
    %v1439 = vmul.f32 %v1412, %v1425
    %v1440 = vmul.f32 %v1413, %v1429
    %v1441 = vmul.f32 %v1414, %v1433
    %s1442 = scalar_lea.vmem [#allocation9], 2
    %v1443 = vld [vmem:[%s1442] ss:$4 sm:$0xf]
    %v1445 = vlaneseq
    %v1446 = vshrl.u32 %v1445, 7
    %v1447 = vsub.s32 0, %v1446
    %v1448 = vrot.slane %v1443, %v1447
    %v1449 = vlaneseq
    %v1450 = vshrl.u32 %v1449, 7
    %v1451 = vsub.s32 1, %v1450
    %v1452 = vrot.slane %v1443, %v1451
    %v1453 = vlaneseq
    %v1454 = vshrl.u32 %v1453, 7
    %v1455 = vsub.s32 2, %v1454
    %v1456 = vrot.slane %v1443, %v1455
    %v1457 = vlaneseq
    %v1458 = vshrl.u32 %v1457, 7
    %v1459 = vsub.s32 3, %v1458
    %v1460 = vrot.slane %v1443, %v1459
    %v1465 = vadd.f32 %v1438, %v1448
    %v1466 = vadd.f32 %v1439, %v1452
    %v1467 = vadd.f32 %v1440, %v1456
    %v1468 = vadd.f32 %v1441, %v1460
    %v1469 = vpack.c.bf16 %v1465, %v1465
    %v1470 = vpack.c.bf16 %v1466, %v1466
    %v1471 = vpack.c.bf16 %v1467, %v1467
    %v1472 = vpack.c.bf16 %v1468, %v1468
    %v1473 = vld [vmem:[#allocation10] sm:$0xff]
    %v1474 = vld [vmem:[#allocation10 + $0x8] sm:$0xff]
    %v1475 = vld [vmem:[#allocation10 + $0x10] sm:$0xff]
    %v1476 = vld [vmem:[#allocation10 + $0x18] sm:$0xff]
    %v1477 = vld [vmem:[#allocation10 + $0x20] sm:$0xff]
    %v1478 = vld [vmem:[#allocation10 + $0x28] sm:$0xff]
    %v1479 = vld [vmem:[#allocation10 + $0x30] sm:$0xff]
    %v1480 = vld [vmem:[#allocation10 + $0x38] sm:$0xff]
    %v1481 = vld [vmem:[#allocation10 + $0x40] sm:$0xff]
    %v1482 = vld [vmem:[#allocation10 + $0x48] sm:$0xff]
    %v1483 = vld [vmem:[#allocation10 + $0x50] sm:$0xff]
    %v1484 = vld [vmem:[#allocation10 + $0x58] sm:$0xff]
    %v1485 = vld [vmem:[#allocation10 + $0x60] sm:$0xff]
    %v1486 = vld [vmem:[#allocation10 + $0x68] sm:$0xff]
    %v1487 = vld [vmem:[#allocation10 + $0x70] sm:$0xff]
    %v1488 = vld [vmem:[#allocation10 + $0x78] sm:$0xff]
    %v1489 = vld [vmem:[#allocation10 + $0x80] sm:$0xff]
    %v1490 = vld [vmem:[#allocation10 + $0x88] sm:$0xff]
    %v1491 = vld [vmem:[#allocation10 + $0x90] sm:$0xff]
    %v1492 = vld [vmem:[#allocation10 + $0x98] sm:$0xff]
    %v1493 = vld [vmem:[#allocation10 + $0xa0] sm:$0xff]
    %v1494 = vld [vmem:[#allocation10 + $0xa8] sm:$0xff]
    %v1495 = vld [vmem:[#allocation10 + $0xb0] sm:$0xff]
    %v1496 = vld [vmem:[#allocation10 + $0xb8] sm:$0xff]
    %v1497 = vld [vmem:[#allocation10 + $0xc0] sm:$0xff]
    %v1498 = vld [vmem:[#allocation10 + $0xc8] sm:$0xff]
    %v1499 = vld [vmem:[#allocation10 + $0xd0] sm:$0xff]
    %v1500 = vld [vmem:[#allocation10 + $0xd8] sm:$0xff]
    %v1501 = vld [vmem:[#allocation10 + $0xe0] sm:$0xff]
    %v1502 = vld [vmem:[#allocation10 + $0xe8] sm:$0xff]
    %v1503 = vld [vmem:[#allocation10 + $0xf0] sm:$0xff]
    %v1504 = vld [vmem:[#allocation10 + $0xf8] sm:$0xff]
    %v1505 = vld [vmem:[#allocation10 + $0x100] sm:$0xff]
    %v1506 = vld [vmem:[#allocation10 + $0x108] sm:$0xff]
    %v1507 = vld [vmem:[#allocation10 + $0x110] sm:$0xff]
    %v1508 = vld [vmem:[#allocation10 + $0x118] sm:$0xff]
    %v1509 = vld [vmem:[#allocation10 + $0x120] sm:$0xff]
    %v1510 = vld [vmem:[#allocation10 + $0x128] sm:$0xff]
    %v1511 = vld [vmem:[#allocation10 + $0x130] sm:$0xff]
    %v1512 = vld [vmem:[#allocation10 + $0x138] sm:$0xff]
    %v1513 = vld [vmem:[#allocation10 + $0x140] sm:$0xff]
    %v1514 = vld [vmem:[#allocation10 + $0x148] sm:$0xff]
    %v1515 = vld [vmem:[#allocation10 + $0x150] sm:$0xff]
    %v1516 = vld [vmem:[#allocation10 + $0x158] sm:$0xff]
    %v1517 = vld [vmem:[#allocation10 + $0x160] sm:$0xff]
    %v1518 = vld [vmem:[#allocation10 + $0x168] sm:$0xff]
    %v1519 = vld [vmem:[#allocation10 + $0x170] sm:$0xff]
    %v1520 = vld [vmem:[#allocation10 + $0x178] sm:$0xff]
    %v1521 = vld [vmem:[#allocation10 + $0x180] sm:$0xff]
    %v1522 = vld [vmem:[#allocation10 + $0x188] sm:$0xff]
    %v1523 = vld [vmem:[#allocation10 + $0x190] sm:$0xff]
    %v1524 = vld [vmem:[#allocation10 + $0x198] sm:$0xff]
    %v1525 = vld [vmem:[#allocation10 + $0x1a0] sm:$0xff]
    %v1526 = vld [vmem:[#allocation10 + $0x1a8] sm:$0xff]
    %v1527 = vld [vmem:[#allocation10 + $0x1b0] sm:$0xff]
    %v1528 = vld [vmem:[#allocation10 + $0x1b8] sm:$0xff]
    %v1529 = vld [vmem:[#allocation10 + $0x1c0] sm:$0xff]
    %v1530 = vld [vmem:[#allocation10 + $0x1c8] sm:$0xff]
    %v1531 = vld [vmem:[#allocation10 + $0x1d0] sm:$0xff]
    %v1532 = vld [vmem:[#allocation10 + $0x1d8] sm:$0xff]
    %v1533 = vld [vmem:[#allocation10 + $0x1e0] sm:$0xff]
    %v1534 = vld [vmem:[#allocation10 + $0x1e8] sm:$0xff]
    %v1535 = vld [vmem:[#allocation10 + $0x1f0] sm:$0xff]
    %v1536 = vld [vmem:[#allocation10 + $0x1f8] sm:$0xff]
    %v1537 = vld [vmem:[%s6] ss:$4 sm:$0x3]
    %v1539 = vlaneseq
    %v1540 = vshrl.u32 %v1539, 7
    %v1541 = vsub.s32 0, %v1540
    %v1542 = vrot.slane %v1537, %v1541
    %v1543 = vlaneseq
    %v1544 = vshrl.u32 %v1543, 7
    %v1545 = vsub.s32 1, %v1544
    %v1546 = vrot.slane %v1537, %v1545
    %v1613 = vunpack.c.l.b16 %v1473
    %v1614 = vunpack.c.h.b16 %v1473
    %v1615 = vunpack.c.l.b16 %v1474
    %v1616 = vunpack.c.h.b16 %v1474
    %v1617 = vunpack.c.l.b16 %v1475
    %v1618 = vunpack.c.h.b16 %v1475
    %v1619 = vunpack.c.l.b16 %v1476
    %v1620 = vunpack.c.h.b16 %v1476
    %v1621 = vunpack.c.l.b16 %v1477
    %v1622 = vunpack.c.h.b16 %v1477
    %v1623 = vunpack.c.l.b16 %v1478
    %v1624 = vunpack.c.h.b16 %v1478
    %v1625 = vunpack.c.l.b16 %v1479
    %v1626 = vunpack.c.h.b16 %v1479
    %v1627 = vunpack.c.l.b16 %v1480
    %v1628 = vunpack.c.h.b16 %v1480
    %v1629 = vunpack.c.l.b16 %v1481
    %v1630 = vunpack.c.h.b16 %v1481
    %v1631 = vunpack.c.l.b16 %v1482
    %v1632 = vunpack.c.h.b16 %v1482
    %v1633 = vunpack.c.l.b16 %v1483
    %v1634 = vunpack.c.h.b16 %v1483
    %v1635 = vunpack.c.l.b16 %v1484
    %v1636 = vunpack.c.h.b16 %v1484
    %v1637 = vunpack.c.l.b16 %v1485
    %v1638 = vunpack.c.h.b16 %v1485
    %v1639 = vunpack.c.l.b16 %v1486
    %v1640 = vunpack.c.h.b16 %v1486
    %v1641 = vunpack.c.l.b16 %v1487
    %v1642 = vunpack.c.h.b16 %v1487
    %v1643 = vunpack.c.l.b16 %v1488
    %v1644 = vunpack.c.h.b16 %v1488
    %v1645 = vunpack.c.l.b16 %v1489
    %v1646 = vunpack.c.h.b16 %v1489
    %v1647 = vunpack.c.l.b16 %v1490
    %v1648 = vunpack.c.h.b16 %v1490
    %v1649 = vunpack.c.l.b16 %v1491
    %v1650 = vunpack.c.h.b16 %v1491
    %v1651 = vunpack.c.l.b16 %v1492
    %v1652 = vunpack.c.h.b16 %v1492
    %v1653 = vunpack.c.l.b16 %v1493
    %v1654 = vunpack.c.h.b16 %v1493
    %v1655 = vunpack.c.l.b16 %v1494
    %v1656 = vunpack.c.h.b16 %v1494
    %v1657 = vunpack.c.l.b16 %v1495
    %v1658 = vunpack.c.h.b16 %v1495
    %v1659 = vunpack.c.l.b16 %v1496
    %v1660 = vunpack.c.h.b16 %v1496
    %v1661 = vunpack.c.l.b16 %v1497
    %v1662 = vunpack.c.h.b16 %v1497
    %v1663 = vunpack.c.l.b16 %v1498
    %v1664 = vunpack.c.h.b16 %v1498
    %v1665 = vunpack.c.l.b16 %v1499
    %v1666 = vunpack.c.h.b16 %v1499
    %v1667 = vunpack.c.l.b16 %v1500
    %v1668 = vunpack.c.h.b16 %v1500
    %v1669 = vunpack.c.l.b16 %v1501
    %v1670 = vunpack.c.h.b16 %v1501
    %v1671 = vunpack.c.l.b16 %v1502
    %v1672 = vunpack.c.h.b16 %v1502
    %v1673 = vunpack.c.l.b16 %v1503
    %v1674 = vunpack.c.h.b16 %v1503
    %v1675 = vunpack.c.l.b16 %v1504
    %v1676 = vunpack.c.h.b16 %v1504
    %v1677 = vunpack.c.l.b16 %v1505
    %v1678 = vunpack.c.h.b16 %v1505
    %v1679 = vunpack.c.l.b16 %v1506
    %v1680 = vunpack.c.h.b16 %v1506
    %v1681 = vunpack.c.l.b16 %v1507
    %v1682 = vunpack.c.h.b16 %v1507
    %v1683 = vunpack.c.l.b16 %v1508
    %v1684 = vunpack.c.h.b16 %v1508
    %v1685 = vunpack.c.l.b16 %v1509
    %v1686 = vunpack.c.h.b16 %v1509
    %v1687 = vunpack.c.l.b16 %v1510
    %v1688 = vunpack.c.h.b16 %v1510
    %v1689 = vunpack.c.l.b16 %v1511
    %v1690 = vunpack.c.h.b16 %v1511
    %v1691 = vunpack.c.l.b16 %v1512
    %v1692 = vunpack.c.h.b16 %v1512
    %v1693 = vunpack.c.l.b16 %v1513
    %v1694 = vunpack.c.h.b16 %v1513
    %v1695 = vunpack.c.l.b16 %v1514
    %v1696 = vunpack.c.h.b16 %v1514
    %v1697 = vunpack.c.l.b16 %v1515
    %v1698 = vunpack.c.h.b16 %v1515
    %v1699 = vunpack.c.l.b16 %v1516
    %v1700 = vunpack.c.h.b16 %v1516
    %v1701 = vunpack.c.l.b16 %v1517
    %v1702 = vunpack.c.h.b16 %v1517
    %v1703 = vunpack.c.l.b16 %v1518
    %v1704 = vunpack.c.h.b16 %v1518
    %v1705 = vunpack.c.l.b16 %v1519
    %v1706 = vunpack.c.h.b16 %v1519
    %v1707 = vunpack.c.l.b16 %v1520
    %v1708 = vunpack.c.h.b16 %v1520
    %v1709 = vunpack.c.l.b16 %v1521
    %v1710 = vunpack.c.h.b16 %v1521
    %v1711 = vunpack.c.l.b16 %v1522
    %v1712 = vunpack.c.h.b16 %v1522
    %v1713 = vunpack.c.l.b16 %v1523
    %v1714 = vunpack.c.h.b16 %v1523
    %v1715 = vunpack.c.l.b16 %v1524
    %v1716 = vunpack.c.h.b16 %v1524
    %v1717 = vunpack.c.l.b16 %v1525
    %v1718 = vunpack.c.h.b16 %v1525
    %v1719 = vunpack.c.l.b16 %v1526
    %v1720 = vunpack.c.h.b16 %v1526
    %v1721 = vunpack.c.l.b16 %v1527
    %v1722 = vunpack.c.h.b16 %v1527
    %v1723 = vunpack.c.l.b16 %v1528
    %v1724 = vunpack.c.h.b16 %v1528
    %v1725 = vunpack.c.l.b16 %v1529
    %v1726 = vunpack.c.h.b16 %v1529
    %v1727 = vunpack.c.l.b16 %v1530
    %v1728 = vunpack.c.h.b16 %v1530
    %v1729 = vunpack.c.l.b16 %v1531
    %v1730 = vunpack.c.h.b16 %v1531
    %v1731 = vunpack.c.l.b16 %v1532
    %v1732 = vunpack.c.h.b16 %v1532
    %v1733 = vunpack.c.l.b16 %v1533
    %v1734 = vunpack.c.h.b16 %v1533
    %v1735 = vunpack.c.l.b16 %v1534
    %v1736 = vunpack.c.h.b16 %v1534
    %v1737 = vunpack.c.l.b16 %v1535
    %v1738 = vunpack.c.h.b16 %v1535
    %v1739 = vunpack.c.l.b16 %v1536
    %v1740 = vunpack.c.h.b16 %v1536
    %v1741 = vpack.c.b16 %v1615, %v1613
    %v1742 = vpack.c.b16 %v1616, %v1614
    %v1743 = vpack.c.b16 %v1619, %v1617
    %v1744 = vpack.c.b16 %v1620, %v1618
    %v1745 = vpack.c.b16 %v1623, %v1621
    %v1746 = vpack.c.b16 %v1624, %v1622
    %v1747 = vpack.c.b16 %v1627, %v1625
    %v1748 = vpack.c.b16 %v1628, %v1626
    %v1749 = vpack.c.b16 %v1631, %v1629
    %v1750 = vpack.c.b16 %v1632, %v1630
    %v1751 = vpack.c.b16 %v1635, %v1633
    %v1752 = vpack.c.b16 %v1636, %v1634
    %v1753 = vpack.c.b16 %v1639, %v1637
    %v1754 = vpack.c.b16 %v1640, %v1638
    %v1755 = vpack.c.b16 %v1643, %v1641
    %v1756 = vpack.c.b16 %v1644, %v1642
    %v1757 = vpack.c.b16 %v1647, %v1645
    %v1758 = vpack.c.b16 %v1648, %v1646
    %v1759 = vpack.c.b16 %v1651, %v1649
    %v1760 = vpack.c.b16 %v1652, %v1650
    %v1761 = vpack.c.b16 %v1655, %v1653
    %v1762 = vpack.c.b16 %v1656, %v1654
    %v1763 = vpack.c.b16 %v1659, %v1657
    %v1764 = vpack.c.b16 %v1660, %v1658
    %v1765 = vpack.c.b16 %v1663, %v1661
    %v1766 = vpack.c.b16 %v1664, %v1662
    %v1767 = vpack.c.b16 %v1667, %v1665
    %v1768 = vpack.c.b16 %v1668, %v1666
    %v1769 = vpack.c.b16 %v1671, %v1669
    %v1770 = vpack.c.b16 %v1672, %v1670
    %v1771 = vpack.c.b16 %v1675, %v1673
    %v1772 = vpack.c.b16 %v1676, %v1674
    %v1773 = vpack.c.b16 %v1679, %v1677
    %v1774 = vpack.c.b16 %v1680, %v1678
    %v1775 = vpack.c.b16 %v1683, %v1681
    %v1776 = vpack.c.b16 %v1684, %v1682
    %v1777 = vpack.c.b16 %v1687, %v1685
    %v1778 = vpack.c.b16 %v1688, %v1686
    %v1779 = vpack.c.b16 %v1691, %v1689
    %v1780 = vpack.c.b16 %v1692, %v1690
    %v1781 = vpack.c.b16 %v1695, %v1693
    %v1782 = vpack.c.b16 %v1696, %v1694
    %v1783 = vpack.c.b16 %v1699, %v1697
    %v1784 = vpack.c.b16 %v1700, %v1698
    %v1785 = vpack.c.b16 %v1703, %v1701
    %v1786 = vpack.c.b16 %v1704, %v1702
    %v1787 = vpack.c.b16 %v1707, %v1705
    %v1788 = vpack.c.b16 %v1708, %v1706
    %v1789 = vpack.c.b16 %v1711, %v1709
    %v1790 = vpack.c.b16 %v1712, %v1710
    %v1791 = vpack.c.b16 %v1715, %v1713
    %v1792 = vpack.c.b16 %v1716, %v1714
    %v1793 = vpack.c.b16 %v1719, %v1717
    %v1794 = vpack.c.b16 %v1720, %v1718
    %v1795 = vpack.c.b16 %v1723, %v1721
    %v1796 = vpack.c.b16 %v1724, %v1722
    %v1797 = vpack.c.b16 %v1727, %v1725
    %v1798 = vpack.c.b16 %v1728, %v1726
    %v1799 = vpack.c.b16 %v1731, %v1729
    %v1800 = vpack.c.b16 %v1732, %v1730
    %v1801 = vpack.c.b16 %v1735, %v1733
    %v1802 = vpack.c.b16 %v1736, %v1734
    %v1803 = vpack.c.b16 %v1739, %v1737
    %v1804 = vpack.c.b16 %v1740, %v1738
    %1869 = vmatprep.subr.bf16.mxu0 %v1742
    %1870 = vmatpush1.bf16.msra.mxu0 %v1741
    %1871 = vmatprep.subr.bf16.mxu0 %v1744
    %1872 = vmatpush1.bf16.msra.mxu0 %v1743
    %1873 = vmatprep.subr.bf16.mxu0 %v1746
    %1874 = vmatpush1.bf16.msra.mxu0 %v1745
    %1875 = vmatprep.subr.bf16.mxu0 %v1748
    %1876 = vmatpush1.bf16.msra.mxu0 %v1747
    %1877 = vmatprep.subr.bf16.mxu0 %v1750
    %1878 = vmatpush1.bf16.msra.mxu0 %v1749
    %1879 = vmatprep.subr.bf16.mxu0 %v1752
    %1880 = vmatpush1.bf16.msra.mxu0 %v1751
    %1881 = vmatprep.subr.bf16.mxu0 %v1754
    %1882 = vmatpush1.bf16.msra.mxu0 %v1753
    %1883 = vmatprep.subr.bf16.mxu0 %v1756
    %1884 = vmatpush1.bf16.msra.mxu0 %v1755
    %1885 = vmatprep.subr.bf16.mxu0 %v1758
    %1886 = vmatpush1.bf16.msra.mxu0 %v1757
    %1887 = vmatprep.subr.bf16.mxu0 %v1760
    %1888 = vmatpush1.bf16.msra.mxu0 %v1759
    %1889 = vmatprep.subr.bf16.mxu0 %v1762
    %1890 = vmatpush1.bf16.msra.mxu0 %v1761
    %1891 = vmatprep.subr.bf16.mxu0 %v1764
    %1892 = vmatpush1.bf16.msra.mxu0 %v1763
    %1893 = vmatprep.subr.bf16.mxu0 %v1766
    %1894 = vmatpush1.bf16.msra.mxu0 %v1765
    %1895 = vmatprep.subr.bf16.mxu0 %v1768
    %1896 = vmatpush1.bf16.msra.mxu0 %v1767
    %1897 = vmatprep.subr.bf16.mxu0 %v1770
    %1898 = vmatpush1.bf16.msra.mxu0 %v1769
    %1899 = vmatprep.subr.bf16.mxu0 %v1772
    %1900 = vmatpush1.bf16.msra.mxu0 %v1771
    %1901 = vmatprep.mubr.bf16.mxu0 %v1470
    %1902 = vmatmul.mubr.bf16.gmra.mrb[0].mxu0 %v1469
    %v1903 = vpop.f32.mrb[0].mxu0
    %v1904 = vadd.f32 %v1542, %v1903
    %v1905 = vpop.f32.mrb[0].mxu0
    %v1906 = vadd.f32 %v1546, %v1905
    %v1907 = vpop.f32.mrb[0].mxu0
    %v1908 = vpop.f32.mrb[0].mxu0
    %1909 = vdwg.mxu0
    %1910 = vmatprep.subr.bf16.mxu0 %v1774
    %1911 = vmatpush1.bf16.msra.mxu0 %v1773
    %1912 = vmatprep.subr.bf16.mxu0 %v1776
    %1913 = vmatpush1.bf16.msra.mxu0 %v1775
    %1914 = vmatprep.subr.bf16.mxu0 %v1778
    %1915 = vmatpush1.bf16.msra.mxu0 %v1777
    %1916 = vmatprep.subr.bf16.mxu0 %v1780
    %1917 = vmatpush1.bf16.msra.mxu0 %v1779
    %1918 = vmatprep.subr.bf16.mxu0 %v1782
    %1919 = vmatpush1.bf16.msra.mxu0 %v1781
    %1920 = vmatprep.subr.bf16.mxu0 %v1784
    %1921 = vmatpush1.bf16.msra.mxu0 %v1783
    %1922 = vmatprep.subr.bf16.mxu0 %v1786
    %1923 = vmatpush1.bf16.msra.mxu0 %v1785
    %1924 = vmatprep.subr.bf16.mxu0 %v1788
    %1925 = vmatpush1.bf16.msra.mxu0 %v1787
    %1926 = vmatprep.subr.bf16.mxu0 %v1790
    %1927 = vmatpush1.bf16.msra.mxu0 %v1789
    %1928 = vmatprep.subr.bf16.mxu0 %v1792
    %1929 = vmatpush1.bf16.msra.mxu0 %v1791
    %1930 = vmatprep.subr.bf16.mxu0 %v1794
    %1931 = vmatpush1.bf16.msra.mxu0 %v1793
    %1932 = vmatprep.subr.bf16.mxu0 %v1796
    %1933 = vmatpush1.bf16.msra.mxu0 %v1795
    %1934 = vmatprep.subr.bf16.mxu0 %v1798
    %1935 = vmatpush1.bf16.msra.mxu0 %v1797
    %1936 = vmatprep.subr.bf16.mxu0 %v1800
    %1937 = vmatpush1.bf16.msra.mxu0 %v1799
    %1938 = vmatprep.subr.bf16.mxu0 %v1802
    %1939 = vmatpush1.bf16.msra.mxu0 %v1801
    %1940 = vmatprep.subr.bf16.mxu0 %v1804
    %1941 = vmatpush1.bf16.msra.mxu0 %v1803
    %1942 = vmatprep.mubr.bf16.mxu0 %v1472
    %1943 = vmatmul.mubr.bf16.gmra.mrb[0].mxu0 %v1471
    %v1944 = vpop.f32.mrb[0].mxu0
    %v1945 = vadd.f32 %v1904, %v1944
    %v1946 = vpop.f32.mrb[0].mxu0
    %v1947 = vadd.f32 %v1906, %v1946
    %v1948 = vpop.f32.mrb[0].mxu0
    %v1949 = vpop.f32.mrb[0].mxu0
    %1950 = vdwg.mxu0
    %v1951 = vmax.f32 %v1945, 0.0
    %v1952 = vmax.f32 %v1947, 0.0
    %v1953 = vsel %vm323, %v1951, 0.0
    %v1954 = vsel %vm323, %v1952, 0.0
    %v1955 = vadd.f32 %v1953, %v1954
    %1956 = vadd.xlane.f32.xlu0 %v1955
    %v1957 = vpop.xlane.xlu0 %1956
    %v1958 = vrcp.pop 256.0
    %v1959 = vmul.f32 %v1957, %v1958
    %v1960 = vmul.f32 %v1951, %v1951
    %v1961 = vmul.f32 %v1952, %v1952
    %v1962 = vsel %vm323, %v1960, 0.0
    %v1963 = vsel %vm323, %v1961, 0.0
    %v1964 = vadd.f32 %v1962, %v1963
    %1965 = vadd.xlane.f32.xlu0 %v1964
    %v1966 = vpop.xlane.xlu0 %1965
    %v1967 = vmul.f32 %v1966, %v1958
    %v1968 = vmul.f32 %v1959, %v1959
    %v1969 = vsub.f32 %v1967, %v1968
    %v1970 = vmax.f32 %v1969, 0.0
    %v1971 = vsub.f32 %v1951, %v1959
    %v1972 = vsub.f32 %v1952, %v1959
    %v1973 = vadd.f32 %v1970, 1e-05
    %v1974 = vrsqrt.pop %v1973
    %v1975 = vmul.f32 %v1971, %v1974
    %v1976 = vmul.f32 %v1972, %v1974
    %s1977 = scalar_lea.vmem %s6, 1
    %v1978 = vld [vmem:[%s1977] ss:$4 sm:$0x3]
    %v1980 = vlaneseq
    %v1981 = vshrl.u32 %v1980, 7
    %v1982 = vsub.s32 0, %v1981
    %v1983 = vrot.slane %v1978, %v1982
    %v1984 = vlaneseq
    %v1985 = vshrl.u32 %v1984, 7
    %v1986 = vsub.s32 1, %v1985
    %v1987 = vrot.slane %v1978, %v1986
    %v1990 = vmul.f32 %v1975, %v1983
    %v1991 = vmul.f32 %v1976, %v1987
    %s1992 = scalar_lea.vmem %s6, 2
    %v1993 = vld [vmem:[%s1992] ss:$4 sm:$0x3]
    %v1995 = vlaneseq
    %v1996 = vshrl.u32 %v1995, 7
    %v1997 = vsub.s32 0, %v1996
    %v1998 = vrot.slane %v1993, %v1997
    %v1999 = vlaneseq
    %v2000 = vshrl.u32 %v1999, 7
    %v2001 = vsub.s32 1, %v2000
    %v2002 = vrot.slane %v1993, %v2001
    %v2005 = vadd.f32 %v1990, %v1998
    %v2006 = vadd.f32 %v1991, %v2002
    %v2007 = vpack.c.bf16 %v2005, %v2005
    %v2008 = vpack.c.bf16 %v2006, %v2006
    %v2009 = vld [vmem:[#allocation12] sm:$0xff]
    %v2010 = vld [vmem:[#allocation12 + $0x8] sm:$0xff]
    %v2011 = vld [vmem:[#allocation12 + $0x10] sm:$0xff]
    %v2012 = vld [vmem:[#allocation12 + $0x18] sm:$0xff]
    %v2013 = vld [vmem:[#allocation12 + $0x20] sm:$0xff]
    %v2014 = vld [vmem:[#allocation12 + $0x28] sm:$0xff]
    %v2015 = vld [vmem:[#allocation12 + $0x30] sm:$0xff]
    %v2016 = vld [vmem:[#allocation12 + $0x38] sm:$0xff]
    %v2017 = vld [vmem:[#allocation12 + $0x40] sm:$0xff]
    %v2018 = vld [vmem:[#allocation12 + $0x48] sm:$0xff]
    %v2019 = vld [vmem:[#allocation12 + $0x50] sm:$0xff]
    %v2020 = vld [vmem:[#allocation12 + $0x58] sm:$0xff]
    %v2021 = vld [vmem:[#allocation12 + $0x60] sm:$0xff]
    %v2022 = vld [vmem:[#allocation12 + $0x68] sm:$0xff]
    %v2023 = vld [vmem:[#allocation12 + $0x70] sm:$0xff]
    %v2024 = vld [vmem:[#allocation12 + $0x78] sm:$0xff]
    %v2025 = vld [vmem:[#allocation12 + $0x80] sm:$0xff]
    %v2026 = vld [vmem:[#allocation12 + $0x88] sm:$0xff]
    %v2027 = vld [vmem:[#allocation12 + $0x90] sm:$0xff]
    %v2028 = vld [vmem:[#allocation12 + $0x98] sm:$0xff]
    %v2029 = vld [vmem:[#allocation12 + $0xa0] sm:$0xff]
    %v2030 = vld [vmem:[#allocation12 + $0xa8] sm:$0xff]
    %v2031 = vld [vmem:[#allocation12 + $0xb0] sm:$0xff]
    %v2032 = vld [vmem:[#allocation12 + $0xb8] sm:$0xff]
    %v2033 = vld [vmem:[#allocation12 + $0xc0] sm:$0xff]
    %v2034 = vld [vmem:[#allocation12 + $0xc8] sm:$0xff]
    %v2035 = vld [vmem:[#allocation12 + $0xd0] sm:$0xff]
    %v2036 = vld [vmem:[#allocation12 + $0xd8] sm:$0xff]
    %v2037 = vld [vmem:[#allocation12 + $0xe0] sm:$0xff]
    %v2038 = vld [vmem:[#allocation12 + $0xe8] sm:$0xff]
    %v2039 = vld [vmem:[#allocation12 + $0xf0] sm:$0xff]
    %v2040 = vld [vmem:[#allocation12 + $0xf8] sm:$0xff]
    %v2041 = vld [vmem:[%s8] ss:$4 sm:$0x3]
    %v2043 = vlaneseq
    %v2044 = vshrl.u32 %v2043, 7
    %v2045 = vsub.s32 0, %v2044
    %v2046 = vrot.slane %v2041, %v2045
    %v2047 = vlaneseq
    %v2048 = vshrl.u32 %v2047, 7
    %v2049 = vsub.s32 1, %v2048
    %v2050 = vrot.slane %v2041, %v2049
    %v2085 = vunpack.c.l.b16 %v2009
    %v2086 = vunpack.c.h.b16 %v2009
    %v2087 = vunpack.c.l.b16 %v2010
    %v2088 = vunpack.c.h.b16 %v2010
    %v2089 = vunpack.c.l.b16 %v2011
    %v2090 = vunpack.c.h.b16 %v2011
    %v2091 = vunpack.c.l.b16 %v2012
    %v2092 = vunpack.c.h.b16 %v2012
    %v2093 = vunpack.c.l.b16 %v2013
    %v2094 = vunpack.c.h.b16 %v2013
    %v2095 = vunpack.c.l.b16 %v2014
    %v2096 = vunpack.c.h.b16 %v2014
    %v2097 = vunpack.c.l.b16 %v2015
    %v2098 = vunpack.c.h.b16 %v2015
    %v2099 = vunpack.c.l.b16 %v2016
    %v2100 = vunpack.c.h.b16 %v2016
    %v2101 = vunpack.c.l.b16 %v2017
    %v2102 = vunpack.c.h.b16 %v2017
    %v2103 = vunpack.c.l.b16 %v2018
    %v2104 = vunpack.c.h.b16 %v2018
    %v2105 = vunpack.c.l.b16 %v2019
    %v2106 = vunpack.c.h.b16 %v2019
    %v2107 = vunpack.c.l.b16 %v2020
    %v2108 = vunpack.c.h.b16 %v2020
    %v2109 = vunpack.c.l.b16 %v2021
    %v2110 = vunpack.c.h.b16 %v2021
    %v2111 = vunpack.c.l.b16 %v2022
    %v2112 = vunpack.c.h.b16 %v2022
    %v2113 = vunpack.c.l.b16 %v2023
    %v2114 = vunpack.c.h.b16 %v2023
    %v2115 = vunpack.c.l.b16 %v2024
    %v2116 = vunpack.c.h.b16 %v2024
    %v2117 = vunpack.c.l.b16 %v2025
    %v2118 = vunpack.c.h.b16 %v2025
    %v2119 = vunpack.c.l.b16 %v2026
    %v2120 = vunpack.c.h.b16 %v2026
    %v2121 = vunpack.c.l.b16 %v2027
    %v2122 = vunpack.c.h.b16 %v2027
    %v2123 = vunpack.c.l.b16 %v2028
    %v2124 = vunpack.c.h.b16 %v2028
    %v2125 = vunpack.c.l.b16 %v2029
    %v2126 = vunpack.c.h.b16 %v2029
    %v2127 = vunpack.c.l.b16 %v2030
    %v2128 = vunpack.c.h.b16 %v2030
    %v2129 = vunpack.c.l.b16 %v2031
    %v2130 = vunpack.c.h.b16 %v2031
    %v2131 = vunpack.c.l.b16 %v2032
    %v2132 = vunpack.c.h.b16 %v2032
    %v2133 = vunpack.c.l.b16 %v2033
    %v2134 = vunpack.c.h.b16 %v2033
    %v2135 = vunpack.c.l.b16 %v2034
    %v2136 = vunpack.c.h.b16 %v2034
    %v2137 = vunpack.c.l.b16 %v2035
    %v2138 = vunpack.c.h.b16 %v2035
    %v2139 = vunpack.c.l.b16 %v2036
    %v2140 = vunpack.c.h.b16 %v2036
    %v2141 = vunpack.c.l.b16 %v2037
    %v2142 = vunpack.c.h.b16 %v2037
    %v2143 = vunpack.c.l.b16 %v2038
    %v2144 = vunpack.c.h.b16 %v2038
    %v2145 = vunpack.c.l.b16 %v2039
    %v2146 = vunpack.c.h.b16 %v2039
    %v2147 = vunpack.c.l.b16 %v2040
    %v2148 = vunpack.c.h.b16 %v2040
    %v2149 = vpack.c.b16 %v2087, %v2085
    %v2150 = vpack.c.b16 %v2088, %v2086
    %v2151 = vpack.c.b16 %v2091, %v2089
    %v2152 = vpack.c.b16 %v2092, %v2090
    %v2153 = vpack.c.b16 %v2095, %v2093
    %v2154 = vpack.c.b16 %v2096, %v2094
    %v2155 = vpack.c.b16 %v2099, %v2097
    %v2156 = vpack.c.b16 %v2100, %v2098
    %v2157 = vpack.c.b16 %v2103, %v2101
    %v2158 = vpack.c.b16 %v2104, %v2102
    %v2159 = vpack.c.b16 %v2107, %v2105
    %v2160 = vpack.c.b16 %v2108, %v2106
    %v2161 = vpack.c.b16 %v2111, %v2109
    %v2162 = vpack.c.b16 %v2112, %v2110
    %v2163 = vpack.c.b16 %v2115, %v2113
    %v2164 = vpack.c.b16 %v2116, %v2114
    %v2165 = vpack.c.b16 %v2119, %v2117
    %v2166 = vpack.c.b16 %v2120, %v2118
    %v2167 = vpack.c.b16 %v2123, %v2121
    %v2168 = vpack.c.b16 %v2124, %v2122
    %v2169 = vpack.c.b16 %v2127, %v2125
    %v2170 = vpack.c.b16 %v2128, %v2126
    %v2171 = vpack.c.b16 %v2131, %v2129
    %v2172 = vpack.c.b16 %v2132, %v2130
    %v2173 = vpack.c.b16 %v2135, %v2133
    %v2174 = vpack.c.b16 %v2136, %v2134
    %v2175 = vpack.c.b16 %v2139, %v2137
    %v2176 = vpack.c.b16 %v2140, %v2138
    %v2177 = vpack.c.b16 %v2143, %v2141
    %v2178 = vpack.c.b16 %v2144, %v2142
    %v2179 = vpack.c.b16 %v2147, %v2145
    %v2180 = vpack.c.b16 %v2148, %v2146
    %2213 = vmatprep.subr.bf16.mxu0 %v2150
    %2214 = vmatpush1.bf16.msra.mxu0 %v2149
    %2215 = vmatprep.subr.bf16.mxu0 %v2152
    %2216 = vmatpush1.bf16.msra.mxu0 %v2151
    %2217 = vmatprep.subr.bf16.mxu0 %v2154
    %2218 = vmatpush1.bf16.msra.mxu0 %v2153
    %2219 = vmatprep.subr.bf16.mxu0 %v2156
    %2220 = vmatpush1.bf16.msra.mxu0 %v2155
    %2221 = vmatprep.subr.bf16.mxu0 %v2158
    %2222 = vmatpush1.bf16.msra.mxu0 %v2157
    %2223 = vmatprep.subr.bf16.mxu0 %v2160
    %2224 = vmatpush1.bf16.msra.mxu0 %v2159
    %2225 = vmatprep.subr.bf16.mxu0 %v2162
    %2226 = vmatpush1.bf16.msra.mxu0 %v2161
    %2227 = vmatprep.subr.bf16.mxu0 %v2164
    %2228 = vmatpush1.bf16.msra.mxu0 %v2163
    %2229 = vmatprep.subr.bf16.mxu0 %v2166
    %2230 = vmatpush1.bf16.msra.mxu0 %v2165
    %2231 = vmatprep.subr.bf16.mxu0 %v2168
    %2232 = vmatpush1.bf16.msra.mxu0 %v2167
    %2233 = vmatprep.subr.bf16.mxu0 %v2170
    %2234 = vmatpush1.bf16.msra.mxu0 %v2169
    %2235 = vmatprep.subr.bf16.mxu0 %v2172
    %2236 = vmatpush1.bf16.msra.mxu0 %v2171
    %2237 = vmatprep.subr.bf16.mxu0 %v2174
    %2238 = vmatpush1.bf16.msra.mxu0 %v2173
    %2239 = vmatprep.subr.bf16.mxu0 %v2176
    %2240 = vmatpush1.bf16.msra.mxu0 %v2175
    %2241 = vmatprep.subr.bf16.mxu0 %v2178
    %2242 = vmatpush1.bf16.msra.mxu0 %v2177
    %2243 = vmatprep.subr.bf16.mxu0 %v2180
    %2244 = vmatpush1.bf16.msra.mxu0 %v2179
    %2245 = vmatprep.mubr.bf16.mxu0 %v2008
    %2246 = vmatmul.mubr.bf16.gmra.mrb[0].mxu0 %v2007
    %v2247 = vpop.f32.mrb[0].mxu0
    %v2248 = vadd.f32 %v2046, %v2247
    %v2249 = vpop.f32.mrb[0].mxu0
    %v2250 = vadd.f32 %v2050, %v2249
    %v2251 = vpop.f32.mrb[0].mxu0
    %v2252 = vpop.f32.mrb[0].mxu0
    %2253 = vdwg.mxu0
    %v2254 = vmax.f32 %v2248, 0.0
    %v2255 = vmax.f32 %v2250, 0.0
    %v2256 = vsel %vm323, %v2254, 0.0
    %v2257 = vsel %vm323, %v2255, 0.0
    %v2258 = vadd.f32 %v2256, %v2257
    %2259 = vadd.xlane.f32.xlu0 %v2258
    %v2260 = vpop.xlane.xlu0 %2259
    %v2261 = vmul.f32 %v2260, %v1958
    %v2262 = vmul.f32 %v2254, %v2254
    %v2263 = vmul.f32 %v2255, %v2255
    %v2264 = vsel %vm323, %v2262, 0.0
    %v2265 = vsel %vm323, %v2263, 0.0
    %v2266 = vadd.f32 %v2264, %v2265
    %2267 = vadd.xlane.f32.xlu0 %v2266
    %v2268 = vpop.xlane.xlu0 %2267
    %v2269 = vmul.f32 %v2268, %v1958
    %v2270 = vmul.f32 %v2261, %v2261
    %v2271 = vsub.f32 %v2269, %v2270
    %v2272 = vmax.f32 %v2271, 0.0
    %v2273 = vsub.f32 %v2254, %v2261
    %v2274 = vsub.f32 %v2255, %v2261
    %v2275 = vadd.f32 %v2272, 1e-05
    %v2276 = vrsqrt.pop %v2275
    %v2277 = vmul.f32 %v2273, %v2276
    %v2278 = vmul.f32 %v2274, %v2276
    %s2279 = scalar_lea.vmem %s8, 1
    %v2280 = vld [vmem:[%s2279] ss:$4 sm:$0x3]
    %v2282 = vlaneseq
    %v2283 = vshrl.u32 %v2282, 7
    %v2284 = vsub.s32 0, %v2283
    %v2285 = vrot.slane %v2280, %v2284
    %v2286 = vlaneseq
    %v2287 = vshrl.u32 %v2286, 7
    %v2288 = vsub.s32 1, %v2287
    %v2289 = vrot.slane %v2280, %v2288
    %v2292 = vmul.f32 %v2277, %v2285
    %v2293 = vmul.f32 %v2278, %v2289
    %s2294 = scalar_lea.vmem %s8, 2
    %v2295 = vld [vmem:[%s2294] ss:$4 sm:$0x3]
    %v2297 = vlaneseq
    %v2298 = vshrl.u32 %v2297, 7
    %v2299 = vsub.s32 0, %v2298
    %v2300 = vrot.slane %v2295, %v2299
    %v2301 = vlaneseq
    %v2302 = vshrl.u32 %v2301, 7
    %v2303 = vsub.s32 1, %v2302
    %v2304 = vrot.slane %v2295, %v2303
    %v2307 = vadd.f32 %v2292, %v2300
    %v2308 = vadd.f32 %v2293, %v2304
    %v2309 = vpack.c.bf16 %v2307, %v2307
    %v2310 = vpack.c.bf16 %v2308, %v2308
    %v2311 = vld [vmem:[#allocation13] sm:$0xf]
    %v2312 = vld [vmem:[#allocation13 + $0x4] sm:$0xf]
    %v2313 = vld [vmem:[#allocation13 + $0x8] sm:$0xf]
    %v2314 = vld [vmem:[#allocation13 + $0xc] sm:$0xf]
    %v2315 = vld [vmem:[#allocation13 + $0x10] sm:$0xf]
    %v2316 = vld [vmem:[#allocation13 + $0x14] sm:$0xf]
    %v2317 = vld [vmem:[#allocation13 + $0x18] sm:$0xf]
    %v2318 = vld [vmem:[#allocation13 + $0x1c] sm:$0xf]
    %v2319 = vld [vmem:[#allocation13 + $0x20] sm:$0xf]
    %v2320 = vld [vmem:[#allocation13 + $0x24] sm:$0xf]
    %v2321 = vld [vmem:[#allocation13 + $0x28] sm:$0xf]
    %v2322 = vld [vmem:[#allocation13 + $0x2c] sm:$0xf]
    %v2323 = vld [vmem:[#allocation13 + $0x30] sm:$0xf]
    %v2324 = vld [vmem:[#allocation13 + $0x34] sm:$0xf]
    %v2325 = vld [vmem:[#allocation13 + $0x38] sm:$0xf]
    %v2326 = vld [vmem:[#allocation13 + $0x3c] sm:$0xf]
    %v2327 = vld [vmem:[#allocation13 + $0x40] sm:$0xf]
    %v2328 = vld [vmem:[#allocation13 + $0x44] sm:$0xf]
    %v2329 = vld [vmem:[#allocation13 + $0x48] sm:$0xf]
    %v2330 = vld [vmem:[#allocation13 + $0x4c] sm:$0xf]
    %v2331 = vld [vmem:[#allocation13 + $0x50] sm:$0xf]
    %v2332 = vld [vmem:[#allocation13 + $0x54] sm:$0xf]
    %v2333 = vld [vmem:[#allocation13 + $0x58] sm:$0xf]
    %v2334 = vld [vmem:[#allocation13 + $0x5c] sm:$0xf]
    %v2335 = vld [vmem:[#allocation13 + $0x60] sm:$0xf]
    %v2336 = vld [vmem:[#allocation13 + $0x64] sm:$0xf]
    %v2337 = vld [vmem:[#allocation13 + $0x68] sm:$0xf]
    %v2338 = vld [vmem:[#allocation13 + $0x6c] sm:$0xf]
    %v2339 = vld [vmem:[#allocation13 + $0x70] sm:$0xf]
    %v2340 = vld [vmem:[#allocation13 + $0x74] sm:$0xf]
    %v2341 = vld [vmem:[#allocation13 + $0x78] sm:$0xf]
    %v2342 = vld [vmem:[#allocation13 + $0x7c] sm:$0xf]
    %v2343 = vld [vmem:[%s10] sm:$0x1]
    %v2344 = vlaneseq
    %v2345 = vshrl.u32 %v2344, 7
    %v2346 = vsub.s32 0, %v2345
    %v2347 = vrot.slane %v2343, %v2346
    %v2380 = vunpack.c.l.b16 %v2311
    %v2381 = vunpack.c.l.b16 %v2312
    %v2382 = vunpack.c.l.b16 %v2313
    %v2383 = vunpack.c.l.b16 %v2314
    %v2384 = vunpack.c.l.b16 %v2315
    %v2385 = vunpack.c.l.b16 %v2316
    %v2386 = vunpack.c.l.b16 %v2317
    %v2387 = vunpack.c.l.b16 %v2318
    %v2388 = vunpack.c.l.b16 %v2319
    %v2389 = vunpack.c.l.b16 %v2320
    %v2390 = vunpack.c.l.b16 %v2321
    %v2391 = vunpack.c.l.b16 %v2322
    %v2392 = vunpack.c.l.b16 %v2323
    %v2393 = vunpack.c.l.b16 %v2324
    %v2394 = vunpack.c.l.b16 %v2325
    %v2395 = vunpack.c.l.b16 %v2326
    %v2396 = vunpack.c.l.b16 %v2327
    %v2397 = vunpack.c.l.b16 %v2328
    %v2398 = vunpack.c.l.b16 %v2329
    %v2399 = vunpack.c.l.b16 %v2330
    %v2400 = vunpack.c.l.b16 %v2331
    %v2401 = vunpack.c.l.b16 %v2332
    %v2402 = vunpack.c.l.b16 %v2333
    %v2403 = vunpack.c.l.b16 %v2334
    %v2404 = vunpack.c.l.b16 %v2335
    %v2405 = vunpack.c.l.b16 %v2336
    %v2406 = vunpack.c.l.b16 %v2337
    %v2407 = vunpack.c.l.b16 %v2338
    %v2408 = vunpack.c.l.b16 %v2339
    %v2409 = vunpack.c.l.b16 %v2340
    %v2410 = vunpack.c.l.b16 %v2341
    %v2411 = vunpack.c.l.b16 %v2342
    %v2412 = vpack.c.b16 %v2381, %v2380
    %v2413 = vpack.c.b16 %v2383, %v2382
    %v2414 = vpack.c.b16 %v2385, %v2384
    %v2415 = vpack.c.b16 %v2387, %v2386
    %v2416 = vpack.c.b16 %v2389, %v2388
    %v2417 = vpack.c.b16 %v2391, %v2390
    %v2418 = vpack.c.b16 %v2393, %v2392
    %v2419 = vpack.c.b16 %v2395, %v2394
    %v2420 = vpack.c.b16 %v2397, %v2396
    %v2421 = vpack.c.b16 %v2399, %v2398
    %v2422 = vpack.c.b16 %v2401, %v2400
    %v2423 = vpack.c.b16 %v2403, %v2402
    %v2424 = vpack.c.b16 %v2405, %v2404
    %v2425 = vpack.c.b16 %v2407, %v2406
    %v2426 = vpack.c.b16 %v2409, %v2408
    %v2427 = vpack.c.b16 %v2411, %v2410
    %2444 = vmatprep.subr.bf16.mxu0 0
    %2445 = vmatpush1.bf16.msra.mxu0 %v2412
    %2446 = vmatprep.subr.bf16.mxu0 0
    %2447 = vmatpush1.bf16.msra.mxu0 %v2413
    %2448 = vmatprep.subr.bf16.mxu0 0
    %2449 = vmatpush1.bf16.msra.mxu0 %v2414
    %2450 = vmatprep.subr.bf16.mxu0 0
    %2451 = vmatpush1.bf16.msra.mxu0 %v2415
    %2452 = vmatprep.subr.bf16.mxu0 0
    %2453 = vmatpush1.bf16.msra.mxu0 %v2416
    %2454 = vmatprep.subr.bf16.mxu0 0
    %2455 = vmatpush1.bf16.msra.mxu0 %v2417
    %2456 = vmatprep.subr.bf16.mxu0 0
    %2457 = vmatpush1.bf16.msra.mxu0 %v2418
    %2458 = vmatprep.subr.bf16.mxu0 0
    %2459 = vmatpush1.bf16.msra.mxu0 %v2419
    %2460 = vmatprep.subr.bf16.mxu0 0
    %2461 = vmatpush1.bf16.msra.mxu0 %v2420
    %2462 = vmatprep.subr.bf16.mxu0 0
    %2463 = vmatpush1.bf16.msra.mxu0 %v2421
    %2464 = vmatprep.subr.bf16.mxu0 0
    %2465 = vmatpush1.bf16.msra.mxu0 %v2422
    %2466 = vmatprep.subr.bf16.mxu0 0
    %2467 = vmatpush1.bf16.msra.mxu0 %v2423
    %2468 = vmatprep.subr.bf16.mxu0 0
    %2469 = vmatpush1.bf16.msra.mxu0 %v2424
    %2470 = vmatprep.subr.bf16.mxu0 0
    %2471 = vmatpush1.bf16.msra.mxu0 %v2425
    %2472 = vmatprep.subr.bf16.mxu0 0
    %2473 = vmatpush1.bf16.msra.mxu0 %v2426
    %2474 = vmatprep.subr.bf16.mxu0 0
    %2475 = vmatpush1.bf16.msra.mxu0 %v2427
    %2476 = vmatprep.mubr.bf16.mxu0 %v2310
    %2477 = vmatmul.mubr.bf16.gmra.mrb[0].mxu0 %v2309
    %v2478 = vpop.f32.mrb[0].mxu0
    %v2479 = vadd.f32 %v2347, %v2478
    %v2480 = vpop.f32.mrb[0].mxu0
    %v2481 = vpop.f32.mrb[0].mxu0
    %v2482 = vpop.f32.mrb[0].mxu0
    %2483 = vdwg.mxu0
    %v2484 = vmax.f32 %v2479, 0.0
    %v2485 = vsel %vm323, %v2484, 0.0
    %2486 = vadd.xlane.f32.xlu0 %v2485
    %v2487 = vpop.xlane.xlu0 %2486
    %v2488 = vrcp.pop 128.0
    %v2489 = vmul.f32 %v2487, %v2488
    %v2490 = vmul.f32 %v2484, %v2484
    %v2491 = vsel %vm323, %v2490, 0.0
    %2492 = vadd.xlane.f32.xlu0 %v2491
    %v2493 = vpop.xlane.xlu0 %2492
    %v2494 = vmul.f32 %v2493, %v2488
    %v2495 = vmul.f32 %v2489, %v2489
    %v2496 = vsub.f32 %v2494, %v2495
    %v2497 = vmax.f32 %v2496, 0.0
    %v2498 = vsub.f32 %v2484, %v2489
    %v2499 = vadd.f32 %v2497, 1e-05
    %v2500 = vrsqrt.pop %v2499
    %v2501 = vmul.f32 %v2498, %v2500
    %v2502 = vld [vmem:[%s10 + $0x1] sm:$0x1]
    %v2503 = vlaneseq
    %v2504 = vshrl.u32 %v2503, 7
    %v2505 = vsub.s32 0, %v2504
    %v2506 = vrot.slane %v2502, %v2505
    %v2507 = vmul.f32 %v2501, %v2506
    %v2508 = vld [vmem:[%s10 + $0x2] sm:$0x1]
    %v2509 = vlaneseq
    %v2510 = vshrl.u32 %v2509, 7
    %v2511 = vsub.s32 0, %v2510
    %v2512 = vrot.slane %v2508, %v2511
    %v2513 = vadd.f32 %v2507, %v2512
    %v2514 = vpack.c.bf16 %v2513, %v2513
    %v2515 = vld [vmem:[#allocation15] sm:$0xf]
    %v2516 = vld [vmem:[#allocation15 + $0x4] sm:$0xf]
    %v2517 = vld [vmem:[#allocation15 + $0x8] sm:$0xf]
    %v2518 = vld [vmem:[#allocation15 + $0xc] sm:$0xf]
    %v2519 = vld [vmem:[#allocation15 + $0x10] sm:$0xf]
    %v2520 = vld [vmem:[#allocation15 + $0x14] sm:$0xf]
    %v2521 = vld [vmem:[#allocation15 + $0x18] sm:$0xf]
    %v2522 = vld [vmem:[#allocation15 + $0x1c] sm:$0xf]
    %v2523 = vld [vmem:[#allocation15 + $0x20] sm:$0xf]
    %v2524 = vld [vmem:[#allocation15 + $0x24] sm:$0xf]
    %v2525 = vld [vmem:[#allocation15 + $0x28] sm:$0xf]
    %v2526 = vld [vmem:[#allocation15 + $0x2c] sm:$0xf]
    %v2527 = vld [vmem:[#allocation15 + $0x30] sm:$0xf]
    %v2528 = vld [vmem:[#allocation15 + $0x34] sm:$0xf]
    %v2529 = vld [vmem:[#allocation15 + $0x38] sm:$0xf]
    %v2530 = vld [vmem:[#allocation15 + $0x3c] sm:$0xf]
    %v2531 = vld [vmem:[%s12] sm:$0x1]
    %v2533 = vlaneseq
    %v2534 = vshrl.u32 %v2533, 7
    %v2535 = vsub.s32 0, %v2534
    %v2536 = vrot.slane %v2531, %v2535
    %v2554 = vunpack.c.l.b16 %v2515
    %v2555 = vunpack.c.l.b16 %v2516
    %v2556 = vunpack.c.l.b16 %v2517
    %v2557 = vunpack.c.l.b16 %v2518
    %v2558 = vunpack.c.l.b16 %v2519
    %v2559 = vunpack.c.l.b16 %v2520
    %v2560 = vunpack.c.l.b16 %v2521
    %v2561 = vunpack.c.l.b16 %v2522
    %v2562 = vunpack.c.l.b16 %v2523
    %v2563 = vunpack.c.l.b16 %v2524
    %v2564 = vunpack.c.l.b16 %v2525
    %v2565 = vunpack.c.l.b16 %v2526
    %v2566 = vunpack.c.l.b16 %v2527
    %v2567 = vunpack.c.l.b16 %v2528
    %v2568 = vunpack.c.l.b16 %v2529
    %v2569 = vunpack.c.l.b16 %v2530
    %v2570 = vpack.c.b16 %v2555, %v2554
    %v2571 = vpack.c.b16 %v2557, %v2556
    %v2572 = vpack.c.b16 %v2559, %v2558
    %v2573 = vpack.c.b16 %v2561, %v2560
    %v2574 = vpack.c.b16 %v2563, %v2562
    %v2575 = vpack.c.b16 %v2565, %v2564
    %v2576 = vpack.c.b16 %v2567, %v2566
    %v2577 = vpack.c.b16 %v2569, %v2568
    %2586 = vmatprep.subr.bf16.mxu0 0
    %2587 = vmatpush1.bf16.msra.mxu0 %v2570
    %2588 = vmatprep.subr.bf16.mxu0 0
    %2589 = vmatpush1.bf16.msra.mxu0 %v2571
    %2590 = vmatprep.subr.bf16.mxu0 0
    %2591 = vmatpush1.bf16.msra.mxu0 %v2572
    %2592 = vmatprep.subr.bf16.mxu0 0
    %2593 = vmatpush1.bf16.msra.mxu0 %v2573
    %2594 = vmatprep.subr.bf16.mxu0 0
    %2595 = vmatpush1.bf16.msra.mxu0 %v2574
    %2596 = vmatprep.subr.bf16.mxu0 0
    %2597 = vmatpush1.bf16.msra.mxu0 %v2575
    %2598 = vmatprep.subr.bf16.mxu0 0
    %2599 = vmatpush1.bf16.msra.mxu0 %v2576
    %2600 = vmatprep.subr.bf16.mxu0 0
    %2601 = vmatpush1.bf16.msra.mxu0 %v2577
    %2602 = vmatprep.subr.bf16.mxu0 0
    %2603 = vmatpush1.bf16.msra.mxu0 0
    %2604 = vmatprep.subr.bf16.mxu0 0
    %2605 = vmatpush1.bf16.msra.mxu0 0
    %2606 = vmatprep.subr.bf16.mxu0 0
    %2607 = vmatpush1.bf16.msra.mxu0 0
    %2608 = vmatprep.subr.bf16.mxu0 0
    %2609 = vmatpush1.bf16.msra.mxu0 0
    %2610 = vmatprep.subr.bf16.mxu0 0
    %2611 = vmatpush1.bf16.msra.mxu0 0
    %2612 = vmatprep.subr.bf16.mxu0 0
    %2613 = vmatpush1.bf16.msra.mxu0 0
    %2614 = vmatprep.subr.bf16.mxu0 0
    %2615 = vmatpush1.bf16.msra.mxu0 0
    %2616 = vmatprep.subr.bf16.mxu0 0
    %2617 = vmatpush1.bf16.msra.mxu0 0
    %2618 = vmatprep.mubr.bf16.mxu0 0
    %2619 = vmatmul.mubr.bf16.gmra.mrb[0].mxu0 %v2514
    %v2620 = vpop.f32.mrb[0].mxu0
    %v2621 = vadd.f32 %v2536, %v2620
    %v2622 = vpop.f32.mrb[0].mxu0
    %v2623 = vpop.f32.mrb[0].mxu0
    %v2624 = vpop.f32.mrb[0].mxu0
    %2625 = vdwg.mxu0
    %v2626 = vtanh.pop %v2621
    %2627 = vst [vmem:[%s13] sm:$0x3] %v2626
    // Predicated region
    $region90: #{actor_forward.1} parent=1 // pred_check
      _
    $region91: #{actor_forward.1} parent=1 // pred_check_branch
      %2629 = sbr.rel (0) target = $region93
    $region92: #{actor_forward.1} parent=1 // pred_region
      _
    $region93: #{actor_forward.1} parent=1 // pred_fallthru
      _
    // Predicated region
    $region94: #{actor_forward.1} parent=1 // pred_check
      _
    $region95: #{actor_forward.1} parent=1 // pred_check_branch
      %2631 = sbr.rel (0) target = $region97
    $region96: #{actor_forward.1} parent=1 // pred_region
      _
    $region97: #{actor_forward.1} parent=1 // pred_fallthru
      _
    %2632 = vsyncpa [#allocation3], 1
    %2633 = vsyncpa [#allocation5], 1
    %2634 = vsyncpa [#allocation8], 1
    %2635 = vsyncpa [#allocation11], 1
    %2636 = vsyncpa [#allocation14], 1

</llo_original>
